<compile_context>
chip_gen: v7x
topology: tpu7x:2x2x1
jax: 0.10.0
libtpu: 0.0.40
codegen_flags: <defaults>
</compile_context>

<pallas_src>
import functools

import jax
import jax.numpy as jnp
from jax import lax
from jax.experimental import pallas as pl
from jax.experimental.pallas import tpu as pltpu


def _mha_kernel(x_ref, wq_ref, wk_ref, wv_ref, wp_ref, bp_ref, o_ref, cat_ref,
                *, num_heads, head_size, compute_dtype):
    """Grid = (B,).  One batch element per step; all heads fused in one invocation."""
    hs = head_size

    x = x_ref[0]                                   # (T, C)   already compute_dtype

    # Stacked QKV projections: one matmul each, depth-C contraction, f32 accumulation.
    q = jnp.dot(x, wq_ref[...], preferred_element_type=jnp.float32)   # (T, H*hs) f32
    k = jnp.dot(x, wk_ref[...], preferred_element_type=jnp.float32)   # (T, H*hs) f32
    v = jnp.dot(x, wv_ref[...], preferred_element_type=jnp.float32)   # (T, H*hs) f32

    T = q.shape[0]
    scale = jnp.float32(head_size) ** -0.5

    # Causal mask: built once per invocation (hoisted out of the head loop).
    row = lax.broadcasted_iota(jnp.int32, (T, T), 0)
    col = lax.broadcasted_iota(jnp.int32, (T, T), 1)
    causal = col <= row
    neg_big = jnp.float32(-1e30)                   # finite: no (-inf)-(-inf) NaN hazard

    # Exact divide on the f32 reference path; EUP fast reciprocal on the perf path.
    use_approx = compute_dtype != jnp.float32

    # Per-head attention (static, unrolled: H is small and compile-time known).
    for h in range(num_heads):
        qh = q[:, h * hs:(h + 1) * hs].astype(compute_dtype)          # (T, hs)
        kh = k[:, h * hs:(h + 1) * hs].astype(compute_dtype)          # (T, hs)
        vh = v[:, h * hs:(h + 1) * hs].astype(compute_dtype)          # (T, hs)

        # q k^T without an explicit transpose: contract the hs dims directly.
        scores = lax.dot_general(
            qh, kh, (((1,), (1,)), ((), ())),
            preferred_element_type=jnp.float32) * scale               # (T, T) f32

        scores = jnp.where(causal, scores, neg_big)

        # Softmax in f32 (VPU/EUP), numerically stabilized.
        m = jnp.max(scores, axis=-1, keepdims=True)
        p = jnp.exp(scores - m)
        denom = jnp.sum(p, axis=-1, keepdims=True)
        att = p * pl.reciprocal(denom, approx=use_approx)

        # Head output into the fused (T, H*hs) scratch (single final projection later).
        cat_ref[:, h * hs:(h + 1) * hs] = jnp.dot(
            att.astype(compute_dtype), vh,
            preferred_element_type=jnp.float32)                       # (T, hs) f32

    # One output projection with a full depth-(H*hs) contraction, plus bias.
    out = jnp.dot(cat_ref[...].astype(compute_dtype), wp_ref[...],
                  preferred_element_type=jnp.float32) + bp_ref[0]     # (T, C) f32
    o_ref[0] = out.astype(o_ref.dtype)


def multi_head_attention(x, wq, wk, wv, w_proj, b_proj, *, compute_dtype=jnp.float32):
    """x: (B, T, C); wq/wk/wv: (H, C, hs); w_proj: (H, hs, C); b_proj: (1, C).

    compute_dtype: dtype of MXU operands (jnp.float32 for exact reference semantics,
    jnp.bfloat16 for the fast path on v6e/v7x).  Accumulation is always f32.
    """
    B, T, C = x.shape
    H, _, hs = wq.shape

    # Stack per-head weights so Q/K/V and the projection are single matmuls:
    #   (H, C, hs) -> (C, H*hs)   and   (H, hs, C) -> (H*hs, C)
    wq_s = jnp.transpose(wq, (1, 0, 2)).reshape(C, H * hs).astype(compute_dtype)
    wk_s = jnp.transpose(wk, (1, 0, 2)).reshape(C, H * hs).astype(compute_dtype)
    wv_s = jnp.transpose(wv, (1, 0, 2)).reshape(C, H * hs).astype(compute_dtype)
    wp_s = w_proj.reshape(H * hs, C).astype(compute_dtype)
    x_c = x.astype(compute_dtype)

    kernel = functools.partial(
        _mha_kernel, num_heads=H, head_size=hs, compute_dtype=compute_dtype)

    return pl.pallas_call(
        kernel,
        out_shape=jax.ShapeDtypeStruct((B, T, C), jnp.float32),
        grid_spec=pltpu.PrefetchScalarGridSpec(
            num_scalar_prefetch=0,
            grid=(B,),
            in_specs=[
                pl.BlockSpec((1, T, C), lambda b: (b, 0, 0)),      # x: one batch per step
                pl.BlockSpec((C, H * hs), lambda b: (0, 0)),       # Wq stacked (resident)
                pl.BlockSpec((C, H * hs), lambda b: (0, 0)),       # Wk stacked (resident)
                pl.BlockSpec((C, H * hs), lambda b: (0, 0)),       # Wv stacked (resident)
                pl.BlockSpec((H * hs, C), lambda b: (0, 0)),       # Wproj full (resident)
                pl.BlockSpec((1, C), lambda b: (0, 0)),            # bproj
            ],
            out_specs=pl.BlockSpec((1, T, C), lambda b: (b, 0, 0)),
            scratch_shapes=[pltpu.VMEM((T, H * hs), jnp.float32)],  # fused head outputs
        ),
        compiler_params=pltpu.CompilerParams(
            # Single batch grid axis, independent across steps -> megacore-shardable
            # (2 TensorCores on v7x).
            dimension_semantics=("parallel",),
        ),
    )(x_c, wq_s, wk_s, wv_s, wp_s, b_proj)


def _reference(x, wq, wk, wv, w_proj, b_proj):
    """Pure-JAX reference mirroring the PyTorch module (eval mode)."""
    B, T, C = x.shape
    H, _, hs = wq.shape
    outs = []
    for h in range(H):
        q = x @ wq[h]
        k = x @ wk[h]
        v = x @ wv[h]
        scores = (q @ jnp.swapaxes(k, -1, -2)) * (hs ** -0.5)
        mask = jnp.tril(jnp.ones((T, T), dtype=bool))
        scores = jnp.where(mask, scores, -jnp.inf)
        att = jax.nn.softmax(scores, axis=-1)
        outs.append(att @ v)
    cat = jnp.concatenate(outs, axis=-1)                     # (B, T, H*hs)
    wp_full = w_proj.reshape(H * hs, C)                      # (H*hs, C)
    return cat @ wp_full + b_proj[0]


if __name__ == "__main__":
    # config: n_embd=32, num_heads=4, head_size=8, block_size (seq)=8, batch=2
    B, T, C = 2, 8, 32
    H, hs = 4, 8

    key = jax.random.PRNGKey(0)
    kx, kq, kk, kv, kp, kb = jax.random.split(key, 6)

    x = jax.random.normal(kx, (B, T, C), dtype=jnp.float32)

    # Deterministic "Linear-like" parameter init (scaled by 1/sqrt(fan_in)).
    wq = jax.random.normal(kq, (H, C, hs), dtype=jnp.float32) * (C ** -0.5)
    wk = jax.random.normal(kk, (H, C, hs), dtype=jnp.float32) * (C ** -0.5)
    wv = jax.random.normal(kv, (H, C, hs), dtype=jnp.float32) * (C ** -0.5)
    w_proj = jax.random.normal(kp, (H, hs, C), dtype=jnp.float32) * ((H * hs) ** -0.5)
    b_proj = jax.random.normal(kb, (1, C), dtype=jnp.float32) * 0.01

    ref = _reference(x, wq, wk, wv, w_proj, b_proj)

    # Exact-semantics path (f32 MXU operands) — matches the PyTorch module tightly.
    out = multi_head_attention(x, wq, wk, wv, w_proj, b_proj)
    out = jax.block_until_ready(out)
    assert out.shape == (B, T, C)
    assert jnp.allclose(out, ref, atol=1e-5, rtol=1e-5), "f32 path mismatch vs reference"

    # Fast path (bf16 MXU operands, f32 accumulation) — v6e/v7x perf configuration.
    out_fast = multi_head_attention(x, wq, wk, wv, w_proj, b_proj,
                                    compute_dtype=jnp.bfloat16)
    out_fast = jax.block_until_ready(out_fast)
    assert jnp.allclose(out_fast, ref, atol=5e-2, rtol=5e-2), "bf16 path mismatch vs reference"

    print("KERNEL_OK")
</pallas_src>

<mosaic_0001>
module attributes {stable_mosaic.version = 11 : i64} {
  func.func @_mha_kernel(%arg0: i32, %arg1: memref<1x8x32xf32, #tpu.memory_space<vmem>>, %arg2: memref<32x32xf32, #tpu.memory_space<vmem>>, %arg3: memref<32x32xf32, #tpu.memory_space<vmem>>, %arg4: memref<32x32xf32, #tpu.memory_space<vmem>>, %arg5: memref<32x32xf32, #tpu.memory_space<vmem>>, %arg6: memref<1x32xf32, #tpu.memory_space<vmem>>, %arg7: memref<1x8x32xf32, #tpu.memory_space<vmem>>, %arg8: memref<8x32xf32, #tpu.memory_space<vmem>>) attributes {dimension_semantics = [#tpu.dimension_semantics<parallel>], iteration_bounds = array<i64: 2>, scalar_prefetch = 0 : i64, scratch_operands = 1 : i64, tpu.core_type = #tpu.core_type<tc>, window_params = [{transform_indices = @transform_0, window_bounds = array<i64: 1, 8, 32>}, {pipeline_mode = #tpu.pipeline_mode<synchronous>, transform_indices = @transform_1, window_bounds = array<i64: 32, 32>}, {pipeline_mode = #tpu.pipeline_mode<synchronous>, transform_indices = @transform_2, window_bounds = array<i64: 32, 32>}, {pipeline_mode = #tpu.pipeline_mode<synchronous>, transform_indices = @transform_3, window_bounds = array<i64: 32, 32>}, {pipeline_mode = #tpu.pipeline_mode<synchronous>, transform_indices = @transform_4, window_bounds = array<i64: 32, 32>}, {pipeline_mode = #tpu.pipeline_mode<synchronous>, transform_indices = @transform_5, window_bounds = array<i64: 1, 32>}, {transform_indices = @transform_6, window_bounds = array<i64: 1, 8, 32>}]} {
    %c0 = arith.constant 0 : index
    %c0_0 = arith.constant 0 : index
    %c0_1 = arith.constant 0 : index
    %0 = vector.load %arg1[%c0, %c0_0, %c0_1] : memref<1x8x32xf32, #tpu.memory_space<vmem>>, vector<1x8x32xf32>
    %1 = vector.shape_cast %0 : vector<1x8x32xf32> to vector<8x32xf32>
    %c0_2 = arith.constant 0 : index
    %c0_3 = arith.constant 0 : index
    %2 = vector.load %arg2[%c0_2, %c0_3] : memref<32x32xf32, #tpu.memory_space<vmem>>, vector<32x32xf32>
    %cst = arith.constant dense<0.000000e+00> : vector<8x32xf32>
    %3 = tpu.matmul %1, %2, %cst {dimension_numbers = #tpu.dot_dimension_numbers<[1], [0], [0], [1], [0, 0, 1, 1], [], []>} : vector<8x32xf32>, vector<32x32xf32>, vector<8x32xf32> -> vector<8x32xf32>
    %c0_4 = arith.constant 0 : index
    %c0_5 = arith.constant 0 : index
    %4 = vector.load %arg3[%c0_4, %c0_5] : memref<32x32xf32, #tpu.memory_space<vmem>>, vector<32x32xf32>
    %cst_6 = arith.constant dense<0.000000e+00> : vector<8x32xf32>
    %5 = tpu.matmul %1, %4, %cst_6 {dimension_numbers = #tpu.dot_dimension_numbers<[1], [0], [0], [1], [0, 0, 1, 1], [], []>} : vector<8x32xf32>, vector<32x32xf32>, vector<8x32xf32> -> vector<8x32xf32>
    %c0_7 = arith.constant 0 : index
    %c0_8 = arith.constant 0 : index
    %6 = vector.load %arg4[%c0_7, %c0_8] : memref<32x32xf32, #tpu.memory_space<vmem>>, vector<32x32xf32>
    %cst_9 = arith.constant dense<0.000000e+00> : vector<8x32xf32>
    %7 = tpu.matmul %1, %6, %cst_9 {dimension_numbers = #tpu.dot_dimension_numbers<[1], [0], [0], [1], [0, 0, 1, 1], [], []>} : vector<8x32xf32>, vector<32x32xf32>, vector<8x32xf32> -> vector<8x32xf32>
    %cst_10 = arith.constant 8.000000e+00 : f32
    %cst_11 = arith.constant -5.000000e-01 : f32
    %8 = math.powf %cst_10, %cst_11 : f32
    %9 = tpu.iota {dimensions = array<i32: 0>} : vector<8x8xi32>
    %10 = tpu.iota {dimensions = array<i32: 1>} : vector<8x8xi32>
    %11 = arith.cmpi sle, %10, %9 : vector<8x8xi32>
    %12 = vector.extract_strided_slice %3 {offsets = [0, 0], sizes = [8, 8], strides = [1, 1]} : vector<8x32xf32> to vector<8x8xf32>
    %13 = vector.extract_strided_slice %5 {offsets = [0, 0], sizes = [8, 8], strides = [1, 1]} : vector<8x32xf32> to vector<8x8xf32>
    %14 = vector.extract_strided_slice %7 {offsets = [0, 0], sizes = [8, 8], strides = [1, 1]} : vector<8x32xf32> to vector<8x8xf32>
    %cst_12 = arith.constant dense<0.000000e+00> : vector<8x8xf32>
    %15 = tpu.matmul %12, %13, %cst_12 {dimension_numbers = #tpu.dot_dimension_numbers<[1], [1], [0], [0], [0, 0, 1, 0], [], []>} : vector<8x8xf32>, vector<8x8xf32>, vector<8x8xf32> -> vector<8x8xf32>
    %16 = vector.broadcast %8 : f32 to vector<8x8xf32>
    %17 = arith.mulf %15, %16 : vector<8x8xf32>
    %cst_13 = arith.constant -1.000000e+30 : f32
    %18 = vector.broadcast %cst_13 : f32 to vector<8x8xf32>
    %19 = arith.select %11, %17, %18 : vector<8x8xi1>, vector<8x8xf32>
    %cst_14 = arith.constant dense<0xFF800000> : vector<8xf32>
    %20 = vector.multi_reduction <maximumf>, %19, %cst_14 [1] : vector<8x8xf32> to vector<8xf32>
    %21 = vector.shape_cast %20 : vector<8xf32> to vector<8x1xf32>
    %22 = vector.broadcast %21 : vector<8x1xf32> to vector<8x8xf32>
    %23 = arith.subf %19, %22 : vector<8x8xf32>
    %24 = math.exp %23 : vector<8x8xf32>
    %cst_15 = arith.constant dense<0.000000e+00> : vector<8xf32>
    %25 = vector.multi_reduction <add>, %24, %cst_15 [1] : vector<8x8xf32> to vector<8xf32>
    %26 = vector.shape_cast %25 : vector<8xf32> to vector<8x1xf32>
    %27 = tpu.reciprocal %26 : vector<8x1xf32> -> vector<8x1xf32>
    %28 = vector.broadcast %27 : vector<8x1xf32> to vector<8x8xf32>
    %29 = arith.mulf %24, %28 : vector<8x8xf32>
    %cst_16 = arith.constant dense<0.000000e+00> : vector<8x8xf32>
    %30 = tpu.matmul %29, %14, %cst_16 {dimension_numbers = #tpu.dot_dimension_numbers<[1], [0], [0], [1], [0, 0, 1, 1], [], []>} : vector<8x8xf32>, vector<8x8xf32>, vector<8x8xf32> -> vector<8x8xf32>
    %c0_17 = arith.constant 0 : index
    %c0_18 = arith.constant 0 : index
    %31 = vector.load %arg8[%c0_17, %c0_18] : memref<8x32xf32, #tpu.memory_space<vmem>>, vector<8x8xf32>
    tpu.vector_store %arg8[%c0_17, %c0_18], %30 {strides = array<i32>} : memref<8x32xf32, #tpu.memory_space<vmem>>, vector<8x8xf32>,
    %32 = vector.extract_strided_slice %3 {offsets = [0, 8], sizes = [8, 8], strides = [1, 1]} : vector<8x32xf32> to vector<8x8xf32>
    %33 = vector.extract_strided_slice %5 {offsets = [0, 8], sizes = [8, 8], strides = [1, 1]} : vector<8x32xf32> to vector<8x8xf32>
    %34 = vector.extract_strided_slice %7 {offsets = [0, 8], sizes = [8, 8], strides = [1, 1]} : vector<8x32xf32> to vector<8x8xf32>
    %cst_19 = arith.constant dense<0.000000e+00> : vector<8x8xf32>
    %35 = tpu.matmul %32, %33, %cst_19 {dimension_numbers = #tpu.dot_dimension_numbers<[1], [1], [0], [0], [0, 0, 1, 0], [], []>} : vector<8x8xf32>, vector<8x8xf32>, vector<8x8xf32> -> vector<8x8xf32>
    %36 = vector.broadcast %8 : f32 to vector<8x8xf32>
    %37 = arith.mulf %35, %36 : vector<8x8xf32>
    %cst_20 = arith.constant -1.000000e+30 : f32
    %38 = vector.broadcast %cst_20 : f32 to vector<8x8xf32>
    %39 = arith.select %11, %37, %38 : vector<8x8xi1>, vector<8x8xf32>
    %cst_21 = arith.constant dense<0xFF800000> : vector<8xf32>
    %40 = vector.multi_reduction <maximumf>, %39, %cst_21 [1] : vector<8x8xf32> to vector<8xf32>
    %41 = vector.shape_cast %40 : vector<8xf32> to vector<8x1xf32>
    %42 = vector.broadcast %41 : vector<8x1xf32> to vector<8x8xf32>
    %43 = arith.subf %39, %42 : vector<8x8xf32>
    %44 = math.exp %43 : vector<8x8xf32>
    %cst_22 = arith.constant dense<0.000000e+00> : vector<8xf32>
    %45 = vector.multi_reduction <add>, %44, %cst_22 [1] : vector<8x8xf32> to vector<8xf32>
    %46 = vector.shape_cast %45 : vector<8xf32> to vector<8x1xf32>
    %47 = tpu.reciprocal %46 : vector<8x1xf32> -> vector<8x1xf32>
    %48 = vector.broadcast %47 : vector<8x1xf32> to vector<8x8xf32>
    %49 = arith.mulf %44, %48 : vector<8x8xf32>
    %cst_23 = arith.constant dense<0.000000e+00> : vector<8x8xf32>
    %50 = tpu.matmul %49, %34, %cst_23 {dimension_numbers = #tpu.dot_dimension_numbers<[1], [0], [0], [1], [0, 0, 1, 1], [], []>} : vector<8x8xf32>, vector<8x8xf32>, vector<8x8xf32> -> vector<8x8xf32>
    %c0_24 = arith.constant 0 : index
    %c8 = arith.constant 8 : index
    %51 = vector.load %arg8[%c0_24, %c8] : memref<8x32xf32, #tpu.memory_space<vmem>>, vector<8x8xf32>
    tpu.vector_store %arg8[%c0_24, %c8], %50 {strides = array<i32>} : memref<8x32xf32, #tpu.memory_space<vmem>>, vector<8x8xf32>,
    %52 = vector.extract_strided_slice %3 {offsets = [0, 16], sizes = [8, 8], strides = [1, 1]} : vector<8x32xf32> to vector<8x8xf32>
    %53 = vector.extract_strided_slice %5 {offsets = [0, 16], sizes = [8, 8], strides = [1, 1]} : vector<8x32xf32> to vector<8x8xf32>
    %54 = vector.extract_strided_slice %7 {offsets = [0, 16], sizes = [8, 8], strides = [1, 1]} : vector<8x32xf32> to vector<8x8xf32>
    %cst_25 = arith.constant dense<0.000000e+00> : vector<8x8xf32>
    %55 = tpu.matmul %52, %53, %cst_25 {dimension_numbers = #tpu.dot_dimension_numbers<[1], [1], [0], [0], [0, 0, 1, 0], [], []>} : vector<8x8xf32>, vector<8x8xf32>, vector<8x8xf32> -> vector<8x8xf32>
    %56 = vector.broadcast %8 : f32 to vector<8x8xf32>
    %57 = arith.mulf %55, %56 : vector<8x8xf32>
    %cst_26 = arith.constant -1.000000e+30 : f32
    %58 = vector.broadcast %cst_26 : f32 to vector<8x8xf32>
    %59 = arith.select %11, %57, %58 : vector<8x8xi1>, vector<8x8xf32>
    %cst_27 = arith.constant dense<0xFF800000> : vector<8xf32>
    %60 = vector.multi_reduction <maximumf>, %59, %cst_27 [1] : vector<8x8xf32> to vector<8xf32>
    %61 = vector.shape_cast %60 : vector<8xf32> to vector<8x1xf32>
    %62 = vector.broadcast %61 : vector<8x1xf32> to vector<8x8xf32>
    %63 = arith.subf %59, %62 : vector<8x8xf32>
    %64 = math.exp %63 : vector<8x8xf32>
    %cst_28 = arith.constant dense<0.000000e+00> : vector<8xf32>
    %65 = vector.multi_reduction <add>, %64, %cst_28 [1] : vector<8x8xf32> to vector<8xf32>
    %66 = vector.shape_cast %65 : vector<8xf32> to vector<8x1xf32>
    %67 = tpu.reciprocal %66 : vector<8x1xf32> -> vector<8x1xf32>
    %68 = vector.broadcast %67 : vector<8x1xf32> to vector<8x8xf32>
    %69 = arith.mulf %64, %68 : vector<8x8xf32>
    %cst_29 = arith.constant dense<0.000000e+00> : vector<8x8xf32>
    %70 = tpu.matmul %69, %54, %cst_29 {dimension_numbers = #tpu.dot_dimension_numbers<[1], [0], [0], [1], [0, 0, 1, 1], [], []>} : vector<8x8xf32>, vector<8x8xf32>, vector<8x8xf32> -> vector<8x8xf32>
    %c0_30 = arith.constant 0 : index
    %c16 = arith.constant 16 : index
    %71 = vector.load %arg8[%c0_30, %c16] : memref<8x32xf32, #tpu.memory_space<vmem>>, vector<8x8xf32>
    tpu.vector_store %arg8[%c0_30, %c16], %70 {strides = array<i32>} : memref<8x32xf32, #tpu.memory_space<vmem>>, vector<8x8xf32>,
    %72 = vector.extract_strided_slice %3 {offsets = [0, 24], sizes = [8, 8], strides = [1, 1]} : vector<8x32xf32> to vector<8x8xf32>
    %73 = vector.extract_strided_slice %5 {offsets = [0, 24], sizes = [8, 8], strides = [1, 1]} : vector<8x32xf32> to vector<8x8xf32>
    %74 = vector.extract_strided_slice %7 {offsets = [0, 24], sizes = [8, 8], strides = [1, 1]} : vector<8x32xf32> to vector<8x8xf32>
    %cst_31 = arith.constant dense<0.000000e+00> : vector<8x8xf32>
    %75 = tpu.matmul %72, %73, %cst_31 {dimension_numbers = #tpu.dot_dimension_numbers<[1], [1], [0], [0], [0, 0, 1, 0], [], []>} : vector<8x8xf32>, vector<8x8xf32>, vector<8x8xf32> -> vector<8x8xf32>
    %76 = vector.broadcast %8 : f32 to vector<8x8xf32>
    %77 = arith.mulf %75, %76 : vector<8x8xf32>
    %cst_32 = arith.constant -1.000000e+30 : f32
    %78 = vector.broadcast %cst_32 : f32 to vector<8x8xf32>
    %79 = arith.select %11, %77, %78 : vector<8x8xi1>, vector<8x8xf32>
    %cst_33 = arith.constant dense<0xFF800000> : vector<8xf32>
    %80 = vector.multi_reduction <maximumf>, %79, %cst_33 [1] : vector<8x8xf32> to vector<8xf32>
    %81 = vector.shape_cast %80 : vector<8xf32> to vector<8x1xf32>
    %82 = vector.broadcast %81 : vector<8x1xf32> to vector<8x8xf32>
    %83 = arith.subf %79, %82 : vector<8x8xf32>
    %84 = math.exp %83 : vector<8x8xf32>
    %cst_34 = arith.constant dense<0.000000e+00> : vector<8xf32>
    %85 = vector.multi_reduction <add>, %84, %cst_34 [1] : vector<8x8xf32> to vector<8xf32>
    %86 = vector.shape_cast %85 : vector<8xf32> to vector<8x1xf32>
    %87 = tpu.reciprocal %86 : vector<8x1xf32> -> vector<8x1xf32>
    %88 = vector.broadcast %87 : vector<8x1xf32> to vector<8x8xf32>
    %89 = arith.mulf %84, %88 : vector<8x8xf32>
    %cst_35 = arith.constant dense<0.000000e+00> : vector<8x8xf32>
    %90 = tpu.matmul %89, %74, %cst_35 {dimension_numbers = #tpu.dot_dimension_numbers<[1], [0], [0], [1], [0, 0, 1, 1], [], []>} : vector<8x8xf32>, vector<8x8xf32>, vector<8x8xf32> -> vector<8x8xf32>
    %c0_36 = arith.constant 0 : index
    %c24 = arith.constant 24 : index
    %91 = vector.load %arg8[%c0_36, %c24] : memref<8x32xf32, #tpu.memory_space<vmem>>, vector<8x8xf32>
    tpu.vector_store %arg8[%c0_36, %c24], %90 {strides = array<i32>} : memref<8x32xf32, #tpu.memory_space<vmem>>, vector<8x8xf32>,
    %c0_37 = arith.constant 0 : index
    %c0_38 = arith.constant 0 : index
    %92 = vector.load %arg8[%c0_37, %c0_38] : memref<8x32xf32, #tpu.memory_space<vmem>>, vector<8x32xf32>
    %c0_39 = arith.constant 0 : index
    %c0_40 = arith.constant 0 : index
    %93 = vector.load %arg5[%c0_39, %c0_40] : memref<32x32xf32, #tpu.memory_space<vmem>>, vector<32x32xf32>
    %cst_41 = arith.constant dense<0.000000e+00> : vector<8x32xf32>
    %94 = tpu.matmul %92, %93, %cst_41 {dimension_numbers = #tpu.dot_dimension_numbers<[1], [0], [0], [1], [0, 0, 1, 1], [], []>} : vector<8x32xf32>, vector<32x32xf32>, vector<8x32xf32> -> vector<8x32xf32>
    %c0_42 = arith.constant 0 : index
    %c0_43 = arith.constant 0 : index
    %95 = vector.load %arg6[%c0_42, %c0_43] : memref<1x32xf32, #tpu.memory_space<vmem>>, vector<1x32xf32>
    %96 = vector.shape_cast %95 : vector<1x32xf32> to vector<32xf32>
    %97 = vector.shape_cast %96 : vector<32xf32> to vector<1x32xf32>
    %98 = vector.broadcast %97 : vector<1x32xf32> to vector<8x32xf32>
    %99 = arith.addf %94, %98 : vector<8x32xf32>
    %c0_44 = arith.constant 0 : index
    %c0_45 = arith.constant 0 : index
    %c0_46 = arith.constant 0 : index
    %100 = vector.load %arg7[%c0_44, %c0_45, %c0_46] : memref<1x8x32xf32, #tpu.memory_space<vmem>>, vector<1x8x32xf32>
    %101 = vector.shape_cast %100 : vector<1x8x32xf32> to vector<8x32xf32>
    %102 = vector.shape_cast %99 : vector<8x32xf32> to vector<1x8x32xf32>
    tpu.vector_store %arg7[%c0_44, %c0_45, %c0_46], %102 {strides = array<i32>} : memref<1x8x32xf32, #tpu.memory_space<vmem>>, vector<1x8x32xf32>,
    return
  }
  func.func @transform_0(%arg0: i32) -> (i32, i32, i32) {
    %c0_i32 = arith.constant 0 : i32
    %c0_i32_0 = arith.constant 0 : i32
    %c0_i32_1 = arith.constant 0 : i32
    return %arg0, %c0_i32, %c0_i32_0 : i32, i32, i32
  }
  func.func @transform_1(%arg0: i32) -> (i32, i32) {
    %c0_i32 = arith.constant 0 : i32
    %c0_i32_0 = arith.constant 0 : i32
    %c0_i32_1 = arith.constant 0 : i32
    return %c0_i32, %c0_i32_0 : i32, i32
  }
  func.func @transform_2(%arg0: i32) -> (i32, i32) {
    %c0_i32 = arith.constant 0 : i32
    %c0_i32_0 = arith.constant 0 : i32
    %c0_i32_1 = arith.constant 0 : i32
    return %c0_i32, %c0_i32_0 : i32, i32
  }
  func.func @transform_3(%arg0: i32) -> (i32, i32) {
    %c0_i32 = arith.constant 0 : i32
    %c0_i32_0 = arith.constant 0 : i32
    %c0_i32_1 = arith.constant 0 : i32
    return %c0_i32, %c0_i32_0 : i32, i32
  }
  func.func @transform_4(%arg0: i32) -> (i32, i32) {
    %c0_i32 = arith.constant 0 : i32
    %c0_i32_0 = arith.constant 0 : i32
    %c0_i32_1 = arith.constant 0 : i32
    return %c0_i32, %c0_i32_0 : i32, i32
  }
  func.func @transform_5(%arg0: i32) -> (i32, i32) {
    %c0_i32 = arith.constant 0 : i32
    %c0_i32_0 = arith.constant 0 : i32
    %c0_i32_1 = arith.constant 0 : i32
    return %c0_i32, %c0_i32_0 : i32, i32
  }
  func.func @transform_6(%arg0: i32) -> (i32, i32, i32) {
    %c0_i32 = arith.constant 0 : i32
    %c0_i32_0 = arith.constant 0 : i32
    %c0_i32_1 = arith.constant 0 : i32
    return %arg0, %c0_i32, %c0_i32_0 : i32, i32, i32
  }
}

</mosaic_0001>

<llo_original>
// kernel: tpu_custom_call.1
$region0: #{tpu_custom_call.1}
  #allocation0 [shape = 'u32[]', space=smem, size = 0x4, offset = 0x4, fixed_abs, tag = 'smem constant byte address 0x4 - core index']
  #allocation1 [shape = 'u32[144,128]{1,0:T(1,128)}', space=vmem, size = 0x12000, scoped, tag = 'internal scratch']
  #allocation2 [shape = 'f32[8,32]{1,0:T(8,128)}', space=vmem, size = 0x1000, scoped, tag = 'scratch operand']
  %s0 = inlined_call_operand.hbm [shape: f32[2,8,32], index: 0, kind: input, shape index: {}]
  %s1 = inlined_call_operand.hbm [shape: f32[32,32], index: 1, kind: input, shape index: {}]
  %s2 = inlined_call_operand.hbm [shape: f32[32,32], index: 2, kind: input, shape index: {}]
  %s3 = inlined_call_operand.hbm [shape: f32[32,32], index: 3, kind: input, shape index: {}]
  %s4 = inlined_call_operand.hbm [shape: f32[32,32], index: 4, kind: input, shape index: {}]
  %s5 = inlined_call_operand.vmem [shape: f32[1,32], index: 5, kind: input, shape index: {}]
  %s6 = inlined_call_operand.hbm [shape: f32[2,8,32], index: 6, kind: output, shape index: {}]
  %s7 = sld [smem:[#allocation0]]
  $region77: #{tpu_custom_call.1} parent=0
    _
  %s9 = ssub.s32 1, %s7
  %s10 = scalar_select 0, %s9, %s7
  $region1: #{tpu_custom_call.1} parent=0
    #allocation3 [shape = 'u8[8192]{0}', space=vmem, size = 0x2000, scoped, tag = 'input window, operand 0']
    #allocation4 [shape = 's32[2]{0}', space=sflag, size = 0x8, scoped, tag = 'scoped memory for tpu_custom_call.1']
    #allocation5 [shape = 's32[2]{0}', space=sflag, size = 0x8, scoped, tag = 'scoped memory for tpu_custom_call.1']
    #allocation6 [shape = 'u8[16384]{0}', space=vmem, size = 0x4000, scoped, tag = 'input window, operand 1, single buffered']
    #allocation7 [shape = 's32[1]{0}', space=sflag, size = 0x4, scoped, tag = 'scoped memory for tpu_custom_call.1']
    #allocation8 [shape = 'u8[16384]{0}', space=vmem, size = 0x4000, scoped, tag = 'input window, operand 2, single buffered']
    #allocation9 [shape = 'u8[16384]{0}', space=vmem, size = 0x4000, scoped, tag = 'input window, operand 3, single buffered']
    #allocation10 [shape = 's32[1]{0}', space=sflag, size = 0x4, scoped, tag = 'scoped memory for tpu_custom_call.1']
    #allocation11 [shape = 'u8[16384]{0}', space=vmem, size = 0x4000, scoped, tag = 'input window, operand 4, single buffered']
    #allocation12 [shape = 'u8[8192]{0}', space=vmem, size = 0x2000, scoped, tag = 'output window, operand 0']
    %11 = vsyncpa [#allocation4], 0
    %s12 = scalar_lea.sflag [#allocation4], 1
    %13 = vsyncpa %s12, 0
    %14 = vsyncpa [#allocation7], 0
    %15 = vsyncpa [#allocation10], 0
    %16 = vsyncpa [#allocation5], 0
    %s17 = scalar_lea.sflag [#allocation5], 1
    %18 = vsyncpa %s17, 0
    loop: start=0, step=1, limit=4
    $region2: #{tpu_custom_call.1} parent=1 // loop_pre_header
      _
    $region3: #{tpu_custom_call.1} parent=1 // loop_header
      %s20 = sphi 0, %s24
      %p21 = scmp.ge.s32.totalorder %s20, 4
      %s30 = sphi 0, %s32
      %s33 = sphi 0, %s30
      %s34 = sphi 0, %s33
      %s50 = sphi 0, %s34
      %s54 = sphi 0, %s54
      %s56 = sphi 0, %s54
      %s57 = sphi 0, %s56
      %s71 = sphi 0, %s57
      %s75 = sphi 0, %s75
      %s77 = sphi 0, %s75
      %s78 = sphi 0, %s77
      %s92 = sphi 0, %s78
      %s96 = sphi 0, %s96
      %s98 = sphi 0, %s96
      %s99 = sphi 0, %s98
      %s113 = sphi 0, %s99
      %s117 = sphi 0, %s117
      %s119 = sphi 0, %s117
      %s120 = sphi 0, %s119
      %s134 = sphi 0, %s120
      %s138 = sphi 0, %s138
      %s140 = sphi 0, %s138
      %s141 = sphi 0, %s140
      %s155 = sphi 0, %s141
      %s161 = sphi 0, %s163
      %s164 = sphi 0, %s161
      %s165 = sphi 0, %s164
      %s181 = sphi 0, %s165
    $region4: #{tpu_custom_call.1} parent=1 // loop_header_branch
      %23 = sbr.rel (%p21) target = $region8
    $region5: #{tpu_custom_call.1} parent=1 // loop_body
      %s25 = ssub.s32 %s20, 1
      %s26 = ssub.s32 %s20, 2
      %s27 = sadd.s32 %s20, 1
      %s28 = ssub.s32 %s20, %s27
      %p29 = scmp.eq.s32.totalorder %s28, 0
      %s31 = sadd.s32 %s30, 1
      %s32 = scalar_select %p29, %s30, %s31
      %p35 = pneg %p29
      %p36 = scmp.eq.s32.totalorder %s20, 1
      %p37 = por %p35, %p36
      %p38 = scmp.ne.s32.totalorder %s30, %s33
      %p39 = scmp.eq.s32.totalorder %s20, 0
      %p40 = por %p38, %p39
      %p41 = scmp.ne.s32.totalorder %s30, %s33
      %p42 = scmp.eq.s32.totalorder %s25, 1
      %p43 = por %p41, %p42
      %p44 = scmp.ne.s32.totalorder %s33, %s34
      %p45 = scmp.eq.s32.totalorder %s25, 0
      %p46 = por %p44, %p45
      %p47 = scmp.ne.s32.totalorder %s33, %s34
      %p48 = scmp.eq.s32.totalorder %s26, 1
      %p49 = por %p47, %p48
      %p51 = scmp.ne.s32.totalorder %s34, %s50
      %p52 = scmp.eq.s32.totalorder %s26, 0
      %p53 = por %p51, %p52
      %s55 = sadd.s32 %s54, 1
      %p58 = scmp.eq.s32.totalorder %s20, 1
      %p59 = scmp.ne.s32.totalorder %s54, %s56
      %p60 = scmp.eq.s32.totalorder %s20, 0
      %p61 = por %p59, %p60
      %p62 = scmp.ne.s32.totalorder %s54, %s56
      %p63 = scmp.eq.s32.totalorder %s25, 1
      %p64 = por %p62, %p63
      %p65 = scmp.ne.s32.totalorder %s56, %s57
      %p66 = scmp.eq.s32.totalorder %s25, 0
      %p67 = por %p65, %p66
      %p68 = scmp.ne.s32.totalorder %s56, %s57
      %p69 = scmp.eq.s32.totalorder %s26, 1
      %p70 = por %p68, %p69
      %p72 = scmp.ne.s32.totalorder %s57, %s71
      %p73 = scmp.eq.s32.totalorder %s26, 0
      %p74 = por %p72, %p73
      %s76 = sadd.s32 %s75, 1
      %p79 = scmp.eq.s32.totalorder %s20, 1
      %p80 = scmp.ne.s32.totalorder %s75, %s77
      %p81 = scmp.eq.s32.totalorder %s20, 0
      %p82 = por %p80, %p81
      %p83 = scmp.ne.s32.totalorder %s75, %s77
      %p84 = scmp.eq.s32.totalorder %s25, 1
      %p85 = por %p83, %p84
      %p86 = scmp.ne.s32.totalorder %s77, %s78
      %p87 = scmp.eq.s32.totalorder %s25, 0
      %p88 = por %p86, %p87
      %p89 = scmp.ne.s32.totalorder %s77, %s78
      %p90 = scmp.eq.s32.totalorder %s26, 1
      %p91 = por %p89, %p90
      %p93 = scmp.ne.s32.totalorder %s78, %s92
      %p94 = scmp.eq.s32.totalorder %s26, 0
      %p95 = por %p93, %p94
      %s97 = sadd.s32 %s96, 1
      %p100 = scmp.eq.s32.totalorder %s20, 1
      %p101 = scmp.ne.s32.totalorder %s96, %s98
      %p102 = scmp.eq.s32.totalorder %s20, 0
      %p103 = por %p101, %p102
      %p104 = scmp.ne.s32.totalorder %s96, %s98
      %p105 = scmp.eq.s32.totalorder %s25, 1
      %p106 = por %p104, %p105
      %p107 = scmp.ne.s32.totalorder %s98, %s99
      %p108 = scmp.eq.s32.totalorder %s25, 0
      %p109 = por %p107, %p108
      %p110 = scmp.ne.s32.totalorder %s98, %s99
      %p111 = scmp.eq.s32.totalorder %s26, 1
      %p112 = por %p110, %p111
      %p114 = scmp.ne.s32.totalorder %s99, %s113
      %p115 = scmp.eq.s32.totalorder %s26, 0
      %p116 = por %p114, %p115
      %s118 = sadd.s32 %s117, 1
      %p121 = scmp.eq.s32.totalorder %s20, 1
      %p122 = scmp.ne.s32.totalorder %s117, %s119
      %p123 = scmp.eq.s32.totalorder %s20, 0
      %p124 = por %p122, %p123
      %p125 = scmp.ne.s32.totalorder %s117, %s119
      %p126 = scmp.eq.s32.totalorder %s25, 1
      %p127 = por %p125, %p126
      %p128 = scmp.ne.s32.totalorder %s119, %s120
      %p129 = scmp.eq.s32.totalorder %s25, 0
      %p130 = por %p128, %p129
      %p131 = scmp.ne.s32.totalorder %s119, %s120
      %p132 = scmp.eq.s32.totalorder %s26, 1
      %p133 = por %p131, %p132
      %p135 = scmp.ne.s32.totalorder %s120, %s134
      %p136 = scmp.eq.s32.totalorder %s26, 0
      %p137 = por %p135, %p136
      %s139 = sadd.s32 %s138, 1
      %p142 = scmp.eq.s32.totalorder %s20, 1
      %p143 = scmp.ne.s32.totalorder %s138, %s140
      %p144 = scmp.eq.s32.totalorder %s20, 0
      %p145 = por %p143, %p144
      %p146 = scmp.ne.s32.totalorder %s138, %s140
      %p147 = scmp.eq.s32.totalorder %s25, 1
      %p148 = por %p146, %p147
      %p149 = scmp.ne.s32.totalorder %s140, %s141
      %p150 = scmp.eq.s32.totalorder %s25, 0
      %p151 = por %p149, %p150
      %p152 = scmp.ne.s32.totalorder %s140, %s141
      %p153 = scmp.eq.s32.totalorder %s26, 1
      %p154 = por %p152, %p153
      %p156 = scmp.ne.s32.totalorder %s141, %s155
      %p157 = scmp.eq.s32.totalorder %s26, 0
      %p158 = por %p156, %p157
      %s159 = ssub.s32 %s20, %s27
      %p160 = scmp.eq.s32.totalorder %s159, 0
      %s162 = sadd.s32 %s161, 1
      %s163 = scalar_select %p160, %s161, %s162
      %p166 = pneg %p160
      %p167 = scmp.eq.s32.totalorder %s20, 1
      %p168 = por %p166, %p167
      %p169 = scmp.ne.s32.totalorder %s161, %s164
      %p170 = scmp.eq.s32.totalorder %s20, 0
      %p171 = por %p169, %p170
      %p172 = scmp.ne.s32.totalorder %s161, %s164
      %p173 = scmp.eq.s32.totalorder %s25, 1
      %p174 = por %p172, %p173
      %p175 = scmp.ne.s32.totalorder %s164, %s165
      %p176 = scmp.eq.s32.totalorder %s25, 0
      %p177 = por %p175, %p176
      %p178 = scmp.ne.s32.totalorder %s164, %s165
      %p179 = scmp.eq.s32.totalorder %s26, 1
      %p180 = por %p178, %p179
      %p182 = scmp.ne.s32.totalorder %s165, %s181
      %p183 = scmp.eq.s32.totalorder %s26, 0
      %p184 = por %p182, %p183
      %p185 = scmp.le.s32.totalorder 1, %s20
      %p186 = scmp.lt.s32.totalorder %s20, 3
      %p187 = pnand %p185, %p186
      %p188 = pneg %p187
      // Predicated region
      $region9: #{tpu_custom_call.1} parent=5 // pred_check
        _
      $region10: #{tpu_custom_call.1} parent=5 // pred_check_branch
        %190 = sbr.rel (%p187) target = $region12
      $region11: #{tpu_custom_call.1} parent=5 // pred_region
        %s191 = ssub.s32 %s20, 1
        // Predicated region
        $region13: #{tpu_custom_call.1} parent=11 // pred_check
          %p192 = pneg %p67
        $region14: #{tpu_custom_call.1} parent=11 // pred_check_branch
          %194 = sbr.rel (%p192) target = $region16
        $region15: #{tpu_custom_call.1} parent=11 // pred_region
          %s196 = ssub.s32 512, 512
          %197 = vsyncadd [#allocation7], %s196
          %s198 = sshll.u32 [#allocation6], 4
          %s199 = int_to_ptr.vmem [resolvable:$true] %s198
          %204 = dma.hbm_to_vmem [thread:$0]  %s1, 512, %s199, [#allocation7], 128, 128, 8
        $region16: #{tpu_custom_call.1} parent=11 // pred_fallthru
          _
        // Predicated region
        $region17: #{tpu_custom_call.1} parent=11 // pred_check
          %p205 = pneg %p88
        $region18: #{tpu_custom_call.1} parent=11 // pred_check_branch
          %207 = sbr.rel (%p205) target = $region20
        $region19: #{tpu_custom_call.1} parent=11 // pred_region
          %s209 = ssub.s32 512, 512
          %210 = vsyncadd [#allocation7], %s209
          %s211 = sshll.u32 [#allocation8], 4
          %s212 = int_to_ptr.vmem [resolvable:$true] %s211
          %217 = dma.hbm_to_vmem [thread:$0]  %s2, 512, %s212, [#allocation7], 128, 128, 8
        $region20: #{tpu_custom_call.1} parent=11 // pred_fallthru
          _
        // Predicated region
        $region21: #{tpu_custom_call.1} parent=11 // pred_check
          %p218 = pneg %p109
        $region22: #{tpu_custom_call.1} parent=11 // pred_check_branch
          %220 = sbr.rel (%p218) target = $region24
        $region23: #{tpu_custom_call.1} parent=11 // pred_region
          %s222 = ssub.s32 512, 512
          %223 = vsyncadd [#allocation10], %s222
          %s224 = sshll.u32 [#allocation9], 4
          %s225 = int_to_ptr.vmem [resolvable:$true] %s224
          %230 = dma.hbm_to_vmem [thread:$0]  %s3, 512, %s225, [#allocation10], 128, 128, 8
        $region24: #{tpu_custom_call.1} parent=11 // pred_fallthru
          _
        // Predicated region
        $region25: #{tpu_custom_call.1} parent=11 // pred_check
          %p231 = pneg %p130
        $region26: #{tpu_custom_call.1} parent=11 // pred_check_branch
          %233 = sbr.rel (%p231) target = $region28
        $region27: #{tpu_custom_call.1} parent=11 // pred_region
          %s235 = ssub.s32 512, 512
          %236 = vsyncadd [#allocation10], %s235
          %s237 = sshll.u32 [#allocation11], 4
          %s238 = int_to_ptr.vmem [resolvable:$true] %s237
          %243 = dma.hbm_to_vmem [thread:$0]  %s4, 512, %s238, [#allocation10], 128, 128, 8
        $region28: #{tpu_custom_call.1} parent=11 // pred_fallthru
          _
        // Predicated region
        $region29: #{tpu_custom_call.1} parent=11 // pred_check
          %p244 = pneg %p151
        $region30: #{tpu_custom_call.1} parent=11 // pred_check_branch
          %246 = sbr.rel (%p244) target = $region32
        $region31: #{tpu_custom_call.1} parent=11 // pred_region
          _
        $region32: #{tpu_custom_call.1} parent=11 // pred_fallthru
          _
      $region12: #{tpu_custom_call.1} parent=5 // pred_fallthru
        _
      %p247 = scmp.lt.s32.totalorder %s20, 2
      // Predicated region
      $region33: #{tpu_custom_call.1} parent=5 // pred_check
        %p248 = pneg %p247
      $region34: #{tpu_custom_call.1} parent=5 // pred_check_branch
        %250 = sbr.rel (%p248) target = $region36
      $region35: #{tpu_custom_call.1} parent=5 // pred_region
        // Predicated region
        $region37: #{tpu_custom_call.1} parent=35 // pred_check
          %p251 = pneg %p40
        $region38: #{tpu_custom_call.1} parent=35 // pred_check_branch
          %253 = sbr.rel (%p251) target = $region40
        $region39: #{tpu_custom_call.1} parent=35 // pred_region
          %s254 = sand.u32 %s30, 1
          %s255 = scalar_lea.sflag [#allocation4], %s254
          %s256 = sand.u32 %s30, 1
          %s257 = smul.addr %s256, 8
          %s258 = scalar_lea.vmem [#allocation3], %s257
          %s260 = ssub.s32 128, 128
          %261 = vsyncadd %s255, %s260
          %s262 = smul.addr %s20, 128
          %s263 = scalar_lea.hbm %s0, %s262
          %s265 = sshll.u32 %s258, 4
          %s266 = int_to_ptr.vmem [resolvable:$true] %s265
          %268 = dma.hbm_to_vmem [thread:$0]  %s263, 128, %s266, %s255
        $region40: #{tpu_custom_call.1} parent=35 // pred_fallthru
          _
      $region36: #{tpu_custom_call.1} parent=5 // pred_fallthru
        _
      %p269 = scmp.le.s32.totalorder 1, %s20
      %p270 = scmp.lt.s32.totalorder %s20, 3
      %p271 = pnand %p269, %p270
      %p272 = pneg %p271
      // Predicated region
      $region41: #{tpu_custom_call.1} parent=5 // pred_check
        _
      $region42: #{tpu_custom_call.1} parent=5 // pred_check_branch
        %274 = sbr.rel (%p271) target = $region44
      $region43: #{tpu_custom_call.1} parent=5 // pred_region
        %s275 = ssub.s32 %s20, 1
        %s276 = sand.u32 %s33, 1
        %s277 = scalar_lea.sflag [#allocation4], %s276
        %s278 = sand.u32 %s33, 1
        %s279 = smul.addr %s278, 8
        %s280 = scalar_lea.vmem [#allocation3], %s279
        // Predicated region
        $region45: #{tpu_custom_call.1} parent=43 // pred_check
          %p281 = pneg %p46
        $region46: #{tpu_custom_call.1} parent=43 // pred_check_branch
          %283 = sbr.rel (%p281) target = $region48
        $region47: #{tpu_custom_call.1} parent=43 // pred_region
          %284 = dma.done %s277, 128
        $region48: #{tpu_custom_call.1} parent=43 // pred_fallthru
          _
        // Predicated region
        $region49: #{tpu_custom_call.1} parent=43 // pred_check
          %p285 = pneg %p67
        $region50: #{tpu_custom_call.1} parent=43 // pred_check_branch
          %287 = sbr.rel (%p285) target = $region52
        $region51: #{tpu_custom_call.1} parent=43 // pred_region
          %288 = dma.done [#allocation7], 512
        $region52: #{tpu_custom_call.1} parent=43 // pred_fallthru
          _
        // Predicated region
        $region53: #{tpu_custom_call.1} parent=43 // pred_check
          %p289 = pneg %p88
        $region54: #{tpu_custom_call.1} parent=43 // pred_check_branch
          %291 = sbr.rel (%p289) target = $region56
        $region55: #{tpu_custom_call.1} parent=43 // pred_region
          %292 = dma.done [#allocation7], 512
        $region56: #{tpu_custom_call.1} parent=43 // pred_fallthru
          _
        // Predicated region
        $region57: #{tpu_custom_call.1} parent=43 // pred_check
          %p293 = pneg %p109
        $region58: #{tpu_custom_call.1} parent=43 // pred_check_branch
          %295 = sbr.rel (%p293) target = $region60
        $region59: #{tpu_custom_call.1} parent=43 // pred_region
          %296 = dma.done [#allocation10], 512
        $region60: #{tpu_custom_call.1} parent=43 // pred_fallthru
          _
        // Predicated region
        $region61: #{tpu_custom_call.1} parent=43 // pred_check
          %p297 = pneg %p130
        $region62: #{tpu_custom_call.1} parent=43 // pred_check_branch
          %299 = sbr.rel (%p297) target = $region64
        $region63: #{tpu_custom_call.1} parent=43 // pred_region
          %300 = dma.done [#allocation10], 512
        $region64: #{tpu_custom_call.1} parent=43 // pred_fallthru
          _
        %s301 = sand.u32 %s33, 1
        %s302 = scalar_lea.sflag [#allocation4], %s301
        %s303 = sand.u32 %s33, 1
        %s304 = smul.addr %s303, 8
        %s305 = scalar_lea.vmem [#allocation3], %s304
        %p306 = pneg %p46
        %p307 = pneg %p43
        %p308 = pneg %p67
        %p309 = pneg %p64
        %p310 = pneg %p88
        %p311 = pneg %p85
        %p312 = pneg %p109
        %p313 = pneg %p106
        %p314 = pneg %p130
        %p315 = pneg %p127
        %p316 = pneg %p151
        %p317 = pneg %p148
        %p318 = pneg %p177
        %p319 = pneg %p174
        %s320 = sand.u32 %s164, 1
        %s321 = scalar_lea.sflag [#allocation5], %s320
        %s322 = sand.u32 %s164, 1
        %s323 = smul.addr %s322, 8
        %s324 = scalar_lea.vmem [#allocation12], %s323
        %v325 = vld [vmem:[%s280] sm:$0xff]
        %v326 = vld [vmem:[#allocation6] sm:$0xff]
        %v327 = vld [vmem:[#allocation6 + $0x8] sm:$0xff]
        %v328 = vld [vmem:[#allocation6 + $0x10] sm:$0xff]
        %v329 = vld [vmem:[#allocation6 + $0x18] sm:$0xff]
        %vm330 = vcmask 261120
        %v332 = vsel %vm330, %v325, 0
        %334 = vmatprep.subr.mxu0 0.0
        %335 = vmatpush1.msra.mxu0 %v326
        %336 = vmatprep.subr.mxu0 0.0
        %337 = vmatpush1.msra.mxu0 %v327
        %338 = vmatprep.subr.mxu0 0.0
        %339 = vmatpush1.msra.mxu0 %v328
        %340 = vmatprep.subr.mxu0 0.0
        %341 = vmatpush1.msra.mxu0 %v329
        %342 = vmatprep.subr.mxu0 0.0
        %343 = vmatpush1.msra.mxu0 0.0
        %344 = vmatprep.subr.mxu0 0.0
        %345 = vmatpush1.msra.mxu0 0.0
        %346 = vmatprep.subr.mxu0 0.0
        %347 = vmatpush1.msra.mxu0 0.0
        %348 = vmatprep.subr.mxu0 0.0
        %349 = vmatpush1.msra.mxu0 0.0
        %350 = vmatprep.subr.mxu0 0.0
        %351 = vmatpush1.msra.mxu0 0.0
        %352 = vmatprep.subr.mxu0 0.0
        %353 = vmatpush1.msra.mxu0 0.0
        %354 = vmatprep.subr.mxu0 0.0
        %355 = vmatpush1.msra.mxu0 0.0
        %356 = vmatprep.subr.mxu0 0.0
        %357 = vmatpush1.msra.mxu0 0.0
        %358 = vmatprep.subr.mxu0 0.0
        %359 = vmatpush1.msra.mxu0 0.0
        %360 = vmatprep.subr.mxu0 0.0
        %361 = vmatpush1.msra.mxu0 0.0
        %362 = vmatprep.subr.mxu0 0.0
        %363 = vmatpush1.msra.mxu0 0.0
        %364 = vmatprep.subr.mxu0 0.0
        %365 = vmatpush1.msra.mxu0 0.0
        %366 = vmatprep.subr.mxu0 0.0
        %367 = vmatpush1.msra.mxu0 0.0
        %368 = vmatprep.subr.mxu0 0.0
        %369 = vmatpush1.msra.mxu0 0.0
        %370 = vmatprep.subr.mxu0 0.0
        %371 = vmatpush1.msra.mxu0 0.0
        %372 = vmatprep.subr.mxu0 0.0
        %373 = vmatpush1.msra.mxu0 0.0
        %374 = vmatprep.subr.mxu0 0.0
        %375 = vmatpush1.msra.mxu0 0.0
        %376 = vmatprep.subr.mxu0 0.0
        %377 = vmatpush1.msra.mxu0 0.0
        %378 = vmatprep.subr.mxu0 0.0
        %379 = vmatpush1.msra.mxu0 0.0
        %380 = vmatprep.subr.mxu0 0.0
        %381 = vmatpush1.msra.mxu0 0.0
        %382 = vmatprep.subr.mxu0 0.0
        %383 = vmatpush1.msra.mxu0 0.0
        %384 = vmatprep.subr.mxu0 0.0
        %385 = vmatpush1.msra.mxu0 0.0
        %386 = vmatprep.subr.mxu0 0.0
        %387 = vmatpush1.msra.mxu0 0.0
        %388 = vmatprep.subr.mxu0 0.0
        %389 = vmatpush1.msra.mxu0 0.0
        %390 = vmatprep.subr.mxu0 0.0
        %391 = vmatpush1.msra.mxu0 0.0
        %392 = vmatprep.subr.mxu0 0.0
        %393 = vmatpush1.msra.mxu0 0.0
        %394 = vmatprep.subr.mxu0 0.0
        %395 = vmatpush1.msra.mxu0 0.0
        %396 = vmatprep.subr.mxu0 0.0
        %397 = vmatpush1.msra.mxu0 0.0
        %398 = vmatprep.mubr.f32.mxu0 0.0
        %399 = vmatmul.mubr.f32.gmra.mrb[0].mxu0 %v332
        %v400 = vpop.f32.mrb[0].mxu0
        %v401 = vadd.f32 0.0, %v400
        %v402 = vpop.f32.mrb[0].mxu0
        %403 = vdwg.mxu0
        %v404 = vld [vmem:[#allocation8] sm:$0xff]
        %v405 = vld [vmem:[#allocation8 + $0x8] sm:$0xff]
        %v406 = vld [vmem:[#allocation8 + $0x10] sm:$0xff]
        %v407 = vld [vmem:[#allocation8 + $0x18] sm:$0xff]
        %408 = vmatprep.subr.mxu0 0.0
        %409 = vmatpush1.msra.mxu0 %v404
        %410 = vmatprep.subr.mxu0 0.0
        %411 = vmatpush1.msra.mxu0 %v405
        %412 = vmatprep.subr.mxu0 0.0
        %413 = vmatpush1.msra.mxu0 %v406
        %414 = vmatprep.subr.mxu0 0.0
        %415 = vmatpush1.msra.mxu0 %v407
        %416 = vmatprep.subr.mxu0 0.0
        %417 = vmatpush1.msra.mxu0 0.0
        %418 = vmatprep.subr.mxu0 0.0
        %419 = vmatpush1.msra.mxu0 0.0
        %420 = vmatprep.subr.mxu0 0.0
        %421 = vmatpush1.msra.mxu0 0.0
        %422 = vmatprep.subr.mxu0 0.0
        %423 = vmatpush1.msra.mxu0 0.0
        %424 = vmatprep.subr.mxu0 0.0
        %425 = vmatpush1.msra.mxu0 0.0
        %426 = vmatprep.subr.mxu0 0.0
        %427 = vmatpush1.msra.mxu0 0.0
        %428 = vmatprep.subr.mxu0 0.0
        %429 = vmatpush1.msra.mxu0 0.0
        %430 = vmatprep.subr.mxu0 0.0
        %431 = vmatpush1.msra.mxu0 0.0
        %432 = vmatprep.subr.mxu0 0.0
        %433 = vmatpush1.msra.mxu0 0.0
        %434 = vmatprep.subr.mxu0 0.0
        %435 = vmatpush1.msra.mxu0 0.0
        %436 = vmatprep.subr.mxu0 0.0
        %437 = vmatpush1.msra.mxu0 0.0
        %438 = vmatprep.subr.mxu0 0.0
        %439 = vmatpush1.msra.mxu0 0.0
        %440 = vmatprep.subr.mxu0 0.0
        %441 = vmatpush1.msra.mxu0 0.0
        %442 = vmatprep.subr.mxu0 0.0
        %443 = vmatpush1.msra.mxu0 0.0
        %444 = vmatprep.subr.mxu0 0.0
        %445 = vmatpush1.msra.mxu0 0.0
        %446 = vmatprep.subr.mxu0 0.0
        %447 = vmatpush1.msra.mxu0 0.0
        %448 = vmatprep.subr.mxu0 0.0
        %449 = vmatpush1.msra.mxu0 0.0
        %450 = vmatprep.subr.mxu0 0.0
        %451 = vmatpush1.msra.mxu0 0.0
        %452 = vmatprep.subr.mxu0 0.0
        %453 = vmatpush1.msra.mxu0 0.0
        %454 = vmatprep.subr.mxu0 0.0
        %455 = vmatpush1.msra.mxu0 0.0
        %456 = vmatprep.subr.mxu0 0.0
        %457 = vmatpush1.msra.mxu0 0.0
        %458 = vmatprep.subr.mxu0 0.0
        %459 = vmatpush1.msra.mxu0 0.0
        %460 = vmatprep.subr.mxu0 0.0
        %461 = vmatpush1.msra.mxu0 0.0
        %462 = vmatprep.subr.mxu0 0.0
        %463 = vmatpush1.msra.mxu0 0.0
        %464 = vmatprep.subr.mxu0 0.0
        %465 = vmatpush1.msra.mxu0 0.0
        %466 = vmatprep.subr.mxu0 0.0
        %467 = vmatpush1.msra.mxu0 0.0
        %468 = vmatprep.subr.mxu0 0.0
        %469 = vmatpush1.msra.mxu0 0.0
        %470 = vmatprep.subr.mxu0 0.0
        %471 = vmatpush1.msra.mxu0 0.0
        %472 = vmatprep.mubr.f32.mxu0 0.0
        %473 = vmatmul.mubr.f32.gmra.mrb[0].mxu0 %v332
        %v474 = vpop.f32.mrb[0].mxu0
        %v475 = vadd.f32 0.0, %v474
        %v476 = vpop.f32.mrb[0].mxu0
        %477 = vdwg.mxu0
        %v478 = vld [vmem:[#allocation9] sm:$0xff]
        %v479 = vld [vmem:[#allocation9 + $0x8] sm:$0xff]
        %v480 = vld [vmem:[#allocation9 + $0x10] sm:$0xff]
        %v481 = vld [vmem:[#allocation9 + $0x18] sm:$0xff]
        %482 = vmatprep.subr.mxu0 0.0
        %483 = vmatpush1.msra.mxu0 %v478
        %484 = vmatprep.subr.mxu0 0.0
        %485 = vmatpush1.msra.mxu0 %v479
        %486 = vmatprep.subr.mxu0 0.0
        %487 = vmatpush1.msra.mxu0 %v480
        %488 = vmatprep.subr.mxu0 0.0
        %489 = vmatpush1.msra.mxu0 %v481
        %490 = vmatprep.subr.mxu0 0.0
        %491 = vmatpush1.msra.mxu0 0.0
        %492 = vmatprep.subr.mxu0 0.0
        %493 = vmatpush1.msra.mxu0 0.0
        %494 = vmatprep.subr.mxu0 0.0
        %495 = vmatpush1.msra.mxu0 0.0
        %496 = vmatprep.subr.mxu0 0.0
        %497 = vmatpush1.msra.mxu0 0.0
        %498 = vmatprep.subr.mxu0 0.0
        %499 = vmatpush1.msra.mxu0 0.0
        %500 = vmatprep.subr.mxu0 0.0
        %501 = vmatpush1.msra.mxu0 0.0
        %502 = vmatprep.subr.mxu0 0.0
        %503 = vmatpush1.msra.mxu0 0.0
        %504 = vmatprep.subr.mxu0 0.0
        %505 = vmatpush1.msra.mxu0 0.0
        %506 = vmatprep.subr.mxu0 0.0
        %507 = vmatpush1.msra.mxu0 0.0
        %508 = vmatprep.subr.mxu0 0.0
        %509 = vmatpush1.msra.mxu0 0.0
        %510 = vmatprep.subr.mxu0 0.0
        %511 = vmatpush1.msra.mxu0 0.0
        %512 = vmatprep.subr.mxu0 0.0
        %513 = vmatpush1.msra.mxu0 0.0
        %514 = vmatprep.subr.mxu0 0.0
        %515 = vmatpush1.msra.mxu0 0.0
        %516 = vmatprep.subr.mxu0 0.0
        %517 = vmatpush1.msra.mxu0 0.0
        %518 = vmatprep.subr.mxu0 0.0
        %519 = vmatpush1.msra.mxu0 0.0
        %520 = vmatprep.subr.mxu0 0.0
        %521 = vmatpush1.msra.mxu0 0.0
        %522 = vmatprep.subr.mxu0 0.0
        %523 = vmatpush1.msra.mxu0 0.0
        %524 = vmatprep.subr.mxu0 0.0
        %525 = vmatpush1.msra.mxu0 0.0
        %526 = vmatprep.subr.mxu0 0.0
        %527 = vmatpush1.msra.mxu0 0.0
        %528 = vmatprep.subr.mxu0 0.0
        %529 = vmatpush1.msra.mxu0 0.0
        %530 = vmatprep.subr.mxu0 0.0
        %531 = vmatpush1.msra.mxu0 0.0
        %532 = vmatprep.subr.mxu0 0.0
        %533 = vmatpush1.msra.mxu0 0.0
        %534 = vmatprep.subr.mxu0 0.0
        %535 = vmatpush1.msra.mxu0 0.0
        %536 = vmatprep.subr.mxu0 0.0
        %537 = vmatpush1.msra.mxu0 0.0
        %538 = vmatprep.subr.mxu0 0.0
        %539 = vmatpush1.msra.mxu0 0.0
        %540 = vmatprep.subr.mxu0 0.0
        %541 = vmatpush1.msra.mxu0 0.0
        %542 = vmatprep.subr.mxu0 0.0
        %543 = vmatpush1.msra.mxu0 0.0
        %544 = vmatprep.subr.mxu0 0.0
        %545 = vmatpush1.msra.mxu0 0.0
        %546 = vmatprep.mubr.f32.mxu0 0.0
        %547 = vmatmul.mubr.f32.gmra.mrb[0].mxu0 %v332
        %v548 = vpop.f32.mrb[0].mxu0
        %v549 = vadd.f32 0.0, %v548
        %v550 = vpop.f32.mrb[0].mxu0
        %551 = vdwg.mxu0
        %v552 = vlaneseq
        %v553 = vshrl.u32 %v552, 7
        %v554 = vlaneseq
        %v555 = vand.u32 %v554, 127
        %vm556 = vcmp.le.s32.totalorder %v555, %v553
        %vm557 = vcmask 64512
        %v559 = vsel %vm557, %v401, 0
        %v562 = vsel %vm557, %v475, 0
        %564 = vmatprep.subr.mxu0 0.0
        %565 = vmatpush1.xpose.msra.mxu0 %v562
        %566 = vmatprep.subr.mxu0 0.0
        %567 = vmatpush1.xpose.msra.mxu0 0.0
        %568 = vmatprep.subr.mxu0 0.0
        %569 = vmatpush1.xpose.msra.mxu0 0.0
        %570 = vmatprep.subr.mxu0 0.0
        %571 = vmatpush1.xpose.msra.mxu0 0.0
        %572 = vmatprep.subr.mxu0 0.0
        %573 = vmatpush1.xpose.msra.mxu0 0.0
        %574 = vmatprep.subr.mxu0 0.0
        %575 = vmatpush1.xpose.msra.mxu0 0.0
        %576 = vmatprep.subr.mxu0 0.0
        %577 = vmatpush1.xpose.msra.mxu0 0.0
        %578 = vmatprep.subr.mxu0 0.0
        %579 = vmatpush1.xpose.msra.mxu0 0.0
        %580 = vmatprep.subr.mxu0 0.0
        %581 = vmatpush1.xpose.msra.mxu0 0.0
        %582 = vmatprep.subr.mxu0 0.0
        %583 = vmatpush1.xpose.msra.mxu0 0.0
        %584 = vmatprep.subr.mxu0 0.0
        %585 = vmatpush1.xpose.msra.mxu0 0.0
        %586 = vmatprep.subr.mxu0 0.0
        %587 = vmatpush1.xpose.msra.mxu0 0.0
        %588 = vmatprep.subr.mxu0 0.0
        %589 = vmatpush1.xpose.msra.mxu0 0.0
        %590 = vmatprep.subr.mxu0 0.0
        %591 = vmatpush1.xpose.msra.mxu0 0.0
        %592 = vmatprep.subr.mxu0 0.0
        %593 = vmatpush1.xpose.msra.mxu0 0.0
        %594 = vmatprep.subr.mxu0 0.0
        %595 = vmatpush1.xpose.msra.mxu0 0.0
        %596 = vmatprep.subr.mxu0 0.0
        %597 = vmatpush1.xpose.msra.mxu0 0.0
        %598 = vmatprep.subr.mxu0 0.0
        %599 = vmatpush1.xpose.msra.mxu0 0.0
        %600 = vmatprep.subr.mxu0 0.0
        %601 = vmatpush1.xpose.msra.mxu0 0.0
        %602 = vmatprep.subr.mxu0 0.0
        %603 = vmatpush1.xpose.msra.mxu0 0.0
        %604 = vmatprep.subr.mxu0 0.0
        %605 = vmatpush1.xpose.msra.mxu0 0.0
        %606 = vmatprep.subr.mxu0 0.0
        %607 = vmatpush1.xpose.msra.mxu0 0.0
        %608 = vmatprep.subr.mxu0 0.0
        %609 = vmatpush1.xpose.msra.mxu0 0.0
        %610 = vmatprep.subr.mxu0 0.0
        %611 = vmatpush1.xpose.msra.mxu0 0.0
        %612 = vmatprep.subr.mxu0 0.0
        %613 = vmatpush1.xpose.msra.mxu0 0.0
        %614 = vmatprep.subr.mxu0 0.0
        %615 = vmatpush1.xpose.msra.mxu0 0.0
        %616 = vmatprep.subr.mxu0 0.0
        %617 = vmatpush1.xpose.msra.mxu0 0.0
        %618 = vmatprep.subr.mxu0 0.0
        %619 = vmatpush1.xpose.msra.mxu0 0.0
        %620 = vmatprep.subr.mxu0 0.0
        %621 = vmatpush1.xpose.msra.mxu0 0.0
        %622 = vmatprep.subr.mxu0 0.0
        %623 = vmatpush1.xpose.msra.mxu0 0.0
        %624 = vmatprep.subr.mxu0 0.0
        %625 = vmatpush1.xpose.msra.mxu0 0.0
        %626 = vmatprep.subr.mxu0 0.0
        %627 = vmatpush1.xpose.msra.mxu0 0.0
        %628 = vmatprep.mubr.f32.mxu0 0.0
        %629 = vmatmul.mubr.f32.gmra.mrb[0].mxu0 %v559
        %v630 = vpop.f32.mrb[0].mxu0
        %v631 = vadd.f32 0.0, %v630
        %v632 = vpop.f32.mrb[0].mxu0
        %633 = vdwg.mxu0
        %v634 = vmul.f32 %v631, 0.35355338
        %v635 = vsel %vm556, %v634, -1e+30
        %v636 = vsel %vm557, %v635, -inf
        %637 = vmax.xlane.f32.xlu0 %v636
        %v638 = vpop.xlane.xlu0 %637
        %v639 = vsub.f32 %v635, %v638
        %v640 = vmul.f32 %v639, 1.442695
        %v641 = vpow.pop %v640
        %v642 = vsel %vm557, %v641, 0.0
        %643 = vadd.xlane.f32.xlu0 %v642
        %v644 = vpop.xlane.xlu0 %643
        %v645 = vrcp.pop %v644
        %v646 = vmul.f32 %v641, %v645
        %v648 = vsel %vm557, %v646, 0
        %650 = vmatprep.subr.mxu0 0.0
        %651 = vmatpush1.msra.mxu0 %v549
        %652 = vmatprep.subr.mxu0 0.0
        %653 = vmatpush1.msra.mxu0 0.0
        %654 = vmatprep.subr.mxu0 0.0
        %655 = vmatpush1.msra.mxu0 0.0
        %656 = vmatprep.subr.mxu0 0.0
        %657 = vmatpush1.msra.mxu0 0.0
        %658 = vmatprep.subr.mxu0 0.0
        %659 = vmatpush1.msra.mxu0 0.0
        %660 = vmatprep.subr.mxu0 0.0
        %661 = vmatpush1.msra.mxu0 0.0
        %662 = vmatprep.subr.mxu0 0.0
        %663 = vmatpush1.msra.mxu0 0.0
        %664 = vmatprep.subr.mxu0 0.0
        %665 = vmatpush1.msra.mxu0 0.0
        %666 = vmatprep.subr.mxu0 0.0
        %667 = vmatpush1.msra.mxu0 0.0
        %668 = vmatprep.subr.mxu0 0.0
        %669 = vmatpush1.msra.mxu0 0.0
        %670 = vmatprep.subr.mxu0 0.0
        %671 = vmatpush1.msra.mxu0 0.0
        %672 = vmatprep.subr.mxu0 0.0
        %673 = vmatpush1.msra.mxu0 0.0
        %674 = vmatprep.subr.mxu0 0.0
        %675 = vmatpush1.msra.mxu0 0.0
        %676 = vmatprep.subr.mxu0 0.0
        %677 = vmatpush1.msra.mxu0 0.0
        %678 = vmatprep.subr.mxu0 0.0
        %679 = vmatpush1.msra.mxu0 0.0
        %680 = vmatprep.subr.mxu0 0.0
        %681 = vmatpush1.msra.mxu0 0.0
        %682 = vmatprep.subr.mxu0 0.0
        %683 = vmatpush1.msra.mxu0 0.0
        %684 = vmatprep.subr.mxu0 0.0
        %685 = vmatpush1.msra.mxu0 0.0
        %686 = vmatprep.subr.mxu0 0.0
        %687 = vmatpush1.msra.mxu0 0.0
        %688 = vmatprep.subr.mxu0 0.0
        %689 = vmatpush1.msra.mxu0 0.0
        %690 = vmatprep.subr.mxu0 0.0
        %691 = vmatpush1.msra.mxu0 0.0
        %692 = vmatprep.subr.mxu0 0.0
        %693 = vmatpush1.msra.mxu0 0.0
        %694 = vmatprep.subr.mxu0 0.0
        %695 = vmatpush1.msra.mxu0 0.0
        %696 = vmatprep.subr.mxu0 0.0
        %697 = vmatpush1.msra.mxu0 0.0
        %698 = vmatprep.subr.mxu0 0.0
        %699 = vmatpush1.msra.mxu0 0.0
        %700 = vmatprep.subr.mxu0 0.0
        %701 = vmatpush1.msra.mxu0 0.0
        %702 = vmatprep.subr.mxu0 0.0
        %703 = vmatpush1.msra.mxu0 0.0
        %704 = vmatprep.subr.mxu0 0.0
        %705 = vmatpush1.msra.mxu0 0.0
        %706 = vmatprep.subr.mxu0 0.0
        %707 = vmatpush1.msra.mxu0 0.0
        %708 = vmatprep.subr.mxu0 0.0
        %709 = vmatpush1.msra.mxu0 0.0
        %710 = vmatprep.subr.mxu0 0.0
        %711 = vmatpush1.msra.mxu0 0.0
        %712 = vmatprep.subr.mxu0 0.0
        %713 = vmatpush1.msra.mxu0 0.0
        %714 = vmatprep.mubr.f32.mxu0 0.0
        %715 = vmatmul.mubr.f32.gmra.mrb[0].mxu0 %v648
        %v716 = vpop.f32.mrb[0].mxu0
        %v717 = vadd.f32 0.0, %v716
        %v718 = vpop.f32.mrb[0].mxu0
        %719 = vdwg.mxu0
        %720 = vst.msk [vmem:[#allocation2] sm:$0xff] %vm557, %v717
        %721 = vrot.lane.b32.xlu0 %v401, 120
        %v722 = vpop.permute.xlu0 %721
        %723 = vrot.lane.b32.xlu0 %v475, 120
        %v724 = vpop.permute.xlu0 %723
        %v725 = vsel %vm557, %v722, 0
        %v727 = vsel %vm557, %v724, 0
        %729 = vmatprep.subr.mxu0 0.0
        %730 = vmatpush1.xpose.msra.mxu0 %v727
        %731 = vmatprep.subr.mxu0 0.0
        %732 = vmatpush1.xpose.msra.mxu0 0.0
        %733 = vmatprep.subr.mxu0 0.0
        %734 = vmatpush1.xpose.msra.mxu0 0.0
        %735 = vmatprep.subr.mxu0 0.0
        %736 = vmatpush1.xpose.msra.mxu0 0.0
        %737 = vmatprep.subr.mxu0 0.0
        %738 = vmatpush1.xpose.msra.mxu0 0.0
        %739 = vmatprep.subr.mxu0 0.0
        %740 = vmatpush1.xpose.msra.mxu0 0.0
        %741 = vmatprep.subr.mxu0 0.0
        %742 = vmatpush1.xpose.msra.mxu0 0.0
        %743 = vmatprep.subr.mxu0 0.0
        %744 = vmatpush1.xpose.msra.mxu0 0.0
        %745 = vmatprep.subr.mxu0 0.0
        %746 = vmatpush1.xpose.msra.mxu0 0.0
        %747 = vmatprep.subr.mxu0 0.0
        %748 = vmatpush1.xpose.msra.mxu0 0.0
        %749 = vmatprep.subr.mxu0 0.0
        %750 = vmatpush1.xpose.msra.mxu0 0.0
        %751 = vmatprep.subr.mxu0 0.0
        %752 = vmatpush1.xpose.msra.mxu0 0.0
        %753 = vmatprep.subr.mxu0 0.0
        %754 = vmatpush1.xpose.msra.mxu0 0.0
        %755 = vmatprep.subr.mxu0 0.0
        %756 = vmatpush1.xpose.msra.mxu0 0.0
        %757 = vmatprep.subr.mxu0 0.0
        %758 = vmatpush1.xpose.msra.mxu0 0.0
        %759 = vmatprep.subr.mxu0 0.0
        %760 = vmatpush1.xpose.msra.mxu0 0.0
        %761 = vmatprep.subr.mxu0 0.0
        %762 = vmatpush1.xpose.msra.mxu0 0.0
        %763 = vmatprep.subr.mxu0 0.0
        %764 = vmatpush1.xpose.msra.mxu0 0.0
        %765 = vmatprep.subr.mxu0 0.0
        %766 = vmatpush1.xpose.msra.mxu0 0.0
        %767 = vmatprep.subr.mxu0 0.0
        %768 = vmatpush1.xpose.msra.mxu0 0.0
        %769 = vmatprep.subr.mxu0 0.0
        %770 = vmatpush1.xpose.msra.mxu0 0.0
        %771 = vmatprep.subr.mxu0 0.0
        %772 = vmatpush1.xpose.msra.mxu0 0.0
        %773 = vmatprep.subr.mxu0 0.0
        %774 = vmatpush1.xpose.msra.mxu0 0.0
        %775 = vmatprep.subr.mxu0 0.0
        %776 = vmatpush1.xpose.msra.mxu0 0.0
        %777 = vmatprep.subr.mxu0 0.0
        %778 = vmatpush1.xpose.msra.mxu0 0.0
        %779 = vmatprep.subr.mxu0 0.0
        %780 = vmatpush1.xpose.msra.mxu0 0.0
        %781 = vmatprep.subr.mxu0 0.0
        %782 = vmatpush1.xpose.msra.mxu0 0.0
        %783 = vmatprep.subr.mxu0 0.0
        %784 = vmatpush1.xpose.msra.mxu0 0.0
        %785 = vmatprep.subr.mxu0 0.0
        %786 = vmatpush1.xpose.msra.mxu0 0.0
        %787 = vmatprep.subr.mxu0 0.0
        %788 = vmatpush1.xpose.msra.mxu0 0.0
        %789 = vmatprep.subr.mxu0 0.0
        %790 = vmatpush1.xpose.msra.mxu0 0.0
        %791 = vmatprep.subr.mxu0 0.0
        %792 = vmatpush1.xpose.msra.mxu0 0.0
        %793 = vmatprep.mubr.f32.mxu0 0.0
        %794 = vmatmul.mubr.f32.gmra.mrb[0].mxu0 %v725
        %v795 = vpop.f32.mrb[0].mxu0
        %v796 = vadd.f32 0.0, %v795
        %v797 = vpop.f32.mrb[0].mxu0
        %798 = vdwg.mxu0
        %v799 = vmul.f32 %v796, 0.35355338
        %v800 = vsel %vm556, %v799, -1e+30
        %v801 = vsel %vm557, %v800, -inf
        %802 = vmax.xlane.f32.xlu0 %v801
        %v803 = vpop.xlane.xlu0 %802
        %v804 = vsub.f32 %v800, %v803
        %v805 = vmul.f32 %v804, 1.442695
        %v806 = vpow.pop %v805
        %v807 = vsel %vm557, %v806, 0.0
        %808 = vadd.xlane.f32.xlu0 %v807
        %v809 = vpop.xlane.xlu0 %808
        %v810 = vrcp.pop %v809
        %v811 = vmul.f32 %v806, %v810
        %813 = vrot.lane.b32.xlu0 %v549, 120
        %v814 = vpop.permute.xlu0 %813
        %v817 = vsel %vm557, %v811, 0
        %819 = vmatprep.subr.mxu0 0.0
        %820 = vmatpush1.msra.mxu0 %v814
        %821 = vmatprep.subr.mxu0 0.0
        %822 = vmatpush1.msra.mxu0 0.0
        %823 = vmatprep.subr.mxu0 0.0
        %824 = vmatpush1.msra.mxu0 0.0
        %825 = vmatprep.subr.mxu0 0.0
        %826 = vmatpush1.msra.mxu0 0.0
        %827 = vmatprep.subr.mxu0 0.0
        %828 = vmatpush1.msra.mxu0 0.0
        %829 = vmatprep.subr.mxu0 0.0
        %830 = vmatpush1.msra.mxu0 0.0
        %831 = vmatprep.subr.mxu0 0.0
        %832 = vmatpush1.msra.mxu0 0.0
        %833 = vmatprep.subr.mxu0 0.0
        %834 = vmatpush1.msra.mxu0 0.0
        %835 = vmatprep.subr.mxu0 0.0
        %836 = vmatpush1.msra.mxu0 0.0
        %837 = vmatprep.subr.mxu0 0.0
        %838 = vmatpush1.msra.mxu0 0.0
        %839 = vmatprep.subr.mxu0 0.0
        %840 = vmatpush1.msra.mxu0 0.0
        %841 = vmatprep.subr.mxu0 0.0
        %842 = vmatpush1.msra.mxu0 0.0
        %843 = vmatprep.subr.mxu0 0.0
        %844 = vmatpush1.msra.mxu0 0.0
        %845 = vmatprep.subr.mxu0 0.0
        %846 = vmatpush1.msra.mxu0 0.0
        %847 = vmatprep.subr.mxu0 0.0
        %848 = vmatpush1.msra.mxu0 0.0
        %849 = vmatprep.subr.mxu0 0.0
        %850 = vmatpush1.msra.mxu0 0.0
        %851 = vmatprep.subr.mxu0 0.0
        %852 = vmatpush1.msra.mxu0 0.0
        %853 = vmatprep.subr.mxu0 0.0
        %854 = vmatpush1.msra.mxu0 0.0
        %855 = vmatprep.subr.mxu0 0.0
        %856 = vmatpush1.msra.mxu0 0.0
        %857 = vmatprep.subr.mxu0 0.0
        %858 = vmatpush1.msra.mxu0 0.0
        %859 = vmatprep.subr.mxu0 0.0
        %860 = vmatpush1.msra.mxu0 0.0
        %861 = vmatprep.subr.mxu0 0.0
        %862 = vmatpush1.msra.mxu0 0.0
        %863 = vmatprep.subr.mxu0 0.0
        %864 = vmatpush1.msra.mxu0 0.0
        %865 = vmatprep.subr.mxu0 0.0
        %866 = vmatpush1.msra.mxu0 0.0
        %867 = vmatprep.subr.mxu0 0.0
        %868 = vmatpush1.msra.mxu0 0.0
        %869 = vmatprep.subr.mxu0 0.0
        %870 = vmatpush1.msra.mxu0 0.0
        %871 = vmatprep.subr.mxu0 0.0
        %872 = vmatpush1.msra.mxu0 0.0
        %873 = vmatprep.subr.mxu0 0.0
        %874 = vmatpush1.msra.mxu0 0.0
        %875 = vmatprep.subr.mxu0 0.0
        %876 = vmatpush1.msra.mxu0 0.0
        %877 = vmatprep.subr.mxu0 0.0
        %878 = vmatpush1.msra.mxu0 0.0
        %879 = vmatprep.subr.mxu0 0.0
        %880 = vmatpush1.msra.mxu0 0.0
        %881 = vmatprep.subr.mxu0 0.0
        %882 = vmatpush1.msra.mxu0 0.0
        %883 = vmatprep.mubr.f32.mxu0 0.0
        %884 = vmatmul.mubr.f32.gmra.mrb[0].mxu0 %v817
        %v885 = vpop.f32.mrb[0].mxu0
        %v886 = vadd.f32 0.0, %v885
        %v887 = vpop.f32.mrb[0].mxu0
        %888 = vdwg.mxu0
        %890 = vrot.lane.b32.xlu0 %v886, 8
        %v891 = vpop.permute.xlu0 %890
        %vm893 = vcmask 130112
        %894 = vst.msk [vmem:[#allocation2] sm:$0xff] %vm893, %v891
        %895 = vrot.lane.b32.xlu0 %v401, 112
        %v896 = vpop.permute.xlu0 %895
        %897 = vrot.lane.b32.xlu0 %v475, 112
        %v898 = vpop.permute.xlu0 %897
        %v899 = vsel %vm557, %v896, 0
        %v901 = vsel %vm557, %v898, 0
        %903 = vmatprep.subr.mxu0 0.0
        %904 = vmatpush1.xpose.msra.mxu0 %v901
        %905 = vmatprep.subr.mxu0 0.0
        %906 = vmatpush1.xpose.msra.mxu0 0.0
        %907 = vmatprep.subr.mxu0 0.0
        %908 = vmatpush1.xpose.msra.mxu0 0.0
        %909 = vmatprep.subr.mxu0 0.0
        %910 = vmatpush1.xpose.msra.mxu0 0.0
        %911 = vmatprep.subr.mxu0 0.0
        %912 = vmatpush1.xpose.msra.mxu0 0.0
        %913 = vmatprep.subr.mxu0 0.0
        %914 = vmatpush1.xpose.msra.mxu0 0.0
        %915 = vmatprep.subr.mxu0 0.0
        %916 = vmatpush1.xpose.msra.mxu0 0.0
        %917 = vmatprep.subr.mxu0 0.0
        %918 = vmatpush1.xpose.msra.mxu0 0.0
        %919 = vmatprep.subr.mxu0 0.0
        %920 = vmatpush1.xpose.msra.mxu0 0.0
        %921 = vmatprep.subr.mxu0 0.0
        %922 = vmatpush1.xpose.msra.mxu0 0.0
        %923 = vmatprep.subr.mxu0 0.0
        %924 = vmatpush1.xpose.msra.mxu0 0.0
        %925 = vmatprep.subr.mxu0 0.0
        %926 = vmatpush1.xpose.msra.mxu0 0.0
        %927 = vmatprep.subr.mxu0 0.0
        %928 = vmatpush1.xpose.msra.mxu0 0.0
        %929 = vmatprep.subr.mxu0 0.0
        %930 = vmatpush1.xpose.msra.mxu0 0.0
        %931 = vmatprep.subr.mxu0 0.0
        %932 = vmatpush1.xpose.msra.mxu0 0.0
        %933 = vmatprep.subr.mxu0 0.0
        %934 = vmatpush1.xpose.msra.mxu0 0.0
        %935 = vmatprep.subr.mxu0 0.0
        %936 = vmatpush1.xpose.msra.mxu0 0.0
        %937 = vmatprep.subr.mxu0 0.0
        %938 = vmatpush1.xpose.msra.mxu0 0.0
        %939 = vmatprep.subr.mxu0 0.0
        %940 = vmatpush1.xpose.msra.mxu0 0.0
        %941 = vmatprep.subr.mxu0 0.0
        %942 = vmatpush1.xpose.msra.mxu0 0.0
        %943 = vmatprep.subr.mxu0 0.0
        %944 = vmatpush1.xpose.msra.mxu0 0.0
        %945 = vmatprep.subr.mxu0 0.0
        %946 = vmatpush1.xpose.msra.mxu0 0.0
        %947 = vmatprep.subr.mxu0 0.0
        %948 = vmatpush1.xpose.msra.mxu0 0.0
        %949 = vmatprep.subr.mxu0 0.0
        %950 = vmatpush1.xpose.msra.mxu0 0.0
        %951 = vmatprep.subr.mxu0 0.0
        %952 = vmatpush1.xpose.msra.mxu0 0.0
        %953 = vmatprep.subr.mxu0 0.0
        %954 = vmatpush1.xpose.msra.mxu0 0.0
        %955 = vmatprep.subr.mxu0 0.0
        %956 = vmatpush1.xpose.msra.mxu0 0.0
        %957 = vmatprep.subr.mxu0 0.0
        %958 = vmatpush1.xpose.msra.mxu0 0.0
        %959 = vmatprep.subr.mxu0 0.0
        %960 = vmatpush1.xpose.msra.mxu0 0.0
        %961 = vmatprep.subr.mxu0 0.0
        %962 = vmatpush1.xpose.msra.mxu0 0.0
        %963 = vmatprep.subr.mxu0 0.0
        %964 = vmatpush1.xpose.msra.mxu0 0.0
        %965 = vmatprep.subr.mxu0 0.0
        %966 = vmatpush1.xpose.msra.mxu0 0.0
        %967 = vmatprep.mubr.f32.mxu0 0.0
        %968 = vmatmul.mubr.f32.gmra.mrb[0].mxu0 %v899
        %v969 = vpop.f32.mrb[0].mxu0
        %v970 = vadd.f32 0.0, %v969
        %v971 = vpop.f32.mrb[0].mxu0
        %972 = vdwg.mxu0
        %v973 = vmul.f32 %v970, 0.35355338
        %v974 = vsel %vm556, %v973, -1e+30
        %v975 = vsel %vm557, %v974, -inf
        %976 = vmax.xlane.f32.xlu0 %v975
        %v977 = vpop.xlane.xlu0 %976
        %v978 = vsub.f32 %v974, %v977
        %v979 = vmul.f32 %v978, 1.442695
        %v980 = vpow.pop %v979
        %v981 = vsel %vm557, %v980, 0.0
        %982 = vadd.xlane.f32.xlu0 %v981
        %v983 = vpop.xlane.xlu0 %982
        %v984 = vrcp.pop %v983
        %v985 = vmul.f32 %v980, %v984
        %986 = vrot.lane.b32.xlu0 %v549, 112
        %v987 = vpop.permute.xlu0 %986
        %v990 = vsel %vm557, %v985, 0
        %992 = vmatprep.subr.mxu0 0.0
        %993 = vmatpush1.msra.mxu0 %v987
        %994 = vmatprep.subr.mxu0 0.0
        %995 = vmatpush1.msra.mxu0 0.0
        %996 = vmatprep.subr.mxu0 0.0
        %997 = vmatpush1.msra.mxu0 0.0
        %998 = vmatprep.subr.mxu0 0.0
        %999 = vmatpush1.msra.mxu0 0.0
        %1000 = vmatprep.subr.mxu0 0.0
        %1001 = vmatpush1.msra.mxu0 0.0
        %1002 = vmatprep.subr.mxu0 0.0
        %1003 = vmatpush1.msra.mxu0 0.0
        %1004 = vmatprep.subr.mxu0 0.0
        %1005 = vmatpush1.msra.mxu0 0.0
        %1006 = vmatprep.subr.mxu0 0.0
        %1007 = vmatpush1.msra.mxu0 0.0
        %1008 = vmatprep.subr.mxu0 0.0
        %1009 = vmatpush1.msra.mxu0 0.0
        %1010 = vmatprep.subr.mxu0 0.0
        %1011 = vmatpush1.msra.mxu0 0.0
        %1012 = vmatprep.subr.mxu0 0.0
        %1013 = vmatpush1.msra.mxu0 0.0
        %1014 = vmatprep.subr.mxu0 0.0
        %1015 = vmatpush1.msra.mxu0 0.0
        %1016 = vmatprep.subr.mxu0 0.0
        %1017 = vmatpush1.msra.mxu0 0.0
        %1018 = vmatprep.subr.mxu0 0.0
        %1019 = vmatpush1.msra.mxu0 0.0
        %1020 = vmatprep.subr.mxu0 0.0
        %1021 = vmatpush1.msra.mxu0 0.0
        %1022 = vmatprep.subr.mxu0 0.0
        %1023 = vmatpush1.msra.mxu0 0.0
        %1024 = vmatprep.subr.mxu0 0.0
        %1025 = vmatpush1.msra.mxu0 0.0
        %1026 = vmatprep.subr.mxu0 0.0
        %1027 = vmatpush1.msra.mxu0 0.0
        %1028 = vmatprep.subr.mxu0 0.0
        %1029 = vmatpush1.msra.mxu0 0.0
        %1030 = vmatprep.subr.mxu0 0.0
        %1031 = vmatpush1.msra.mxu0 0.0
        %1032 = vmatprep.subr.mxu0 0.0
        %1033 = vmatpush1.msra.mxu0 0.0
        %1034 = vmatprep.subr.mxu0 0.0
        %1035 = vmatpush1.msra.mxu0 0.0
        %1036 = vmatprep.subr.mxu0 0.0
        %1037 = vmatpush1.msra.mxu0 0.0
        %1038 = vmatprep.subr.mxu0 0.0
        %1039 = vmatpush1.msra.mxu0 0.0
        %1040 = vmatprep.subr.mxu0 0.0
        %1041 = vmatpush1.msra.mxu0 0.0
        %1042 = vmatprep.subr.mxu0 0.0
        %1043 = vmatpush1.msra.mxu0 0.0
        %1044 = vmatprep.subr.mxu0 0.0
        %1045 = vmatpush1.msra.mxu0 0.0
        %1046 = vmatprep.subr.mxu0 0.0
        %1047 = vmatpush1.msra.mxu0 0.0
        %1048 = vmatprep.subr.mxu0 0.0
        %1049 = vmatpush1.msra.mxu0 0.0
        %1050 = vmatprep.subr.mxu0 0.0
        %1051 = vmatpush1.msra.mxu0 0.0
        %1052 = vmatprep.subr.mxu0 0.0
        %1053 = vmatpush1.msra.mxu0 0.0
        %1054 = vmatprep.subr.mxu0 0.0
        %1055 = vmatpush1.msra.mxu0 0.0
        %1056 = vmatprep.mubr.f32.mxu0 0.0
        %1057 = vmatmul.mubr.f32.gmra.mrb[0].mxu0 %v990
        %v1058 = vpop.f32.mrb[0].mxu0
        %v1059 = vadd.f32 0.0, %v1058
        %v1060 = vpop.f32.mrb[0].mxu0
        %1061 = vdwg.mxu0
        %1063 = vrot.lane.b32.xlu0 %v1059, 16
        %v1064 = vpop.permute.xlu0 %1063
        %vm1066 = vcmask 195712
        %1067 = vst.msk [vmem:[#allocation2] sm:$0xff] %vm1066, %v1064
        %1068 = vrot.lane.b32.xlu0 %v401, 104
        %v1069 = vpop.permute.xlu0 %1068
        %1070 = vrot.lane.b32.xlu0 %v475, 104
        %v1071 = vpop.permute.xlu0 %1070
        %v1072 = vsel %vm557, %v1069, 0
        %v1074 = vsel %vm557, %v1071, 0
        %1076 = vmatprep.subr.mxu0 0.0
        %1077 = vmatpush1.xpose.msra.mxu0 %v1074
        %1078 = vmatprep.subr.mxu0 0.0
        %1079 = vmatpush1.xpose.msra.mxu0 0.0
        %1080 = vmatprep.subr.mxu0 0.0
        %1081 = vmatpush1.xpose.msra.mxu0 0.0
        %1082 = vmatprep.subr.mxu0 0.0
        %1083 = vmatpush1.xpose.msra.mxu0 0.0
        %1084 = vmatprep.subr.mxu0 0.0
        %1085 = vmatpush1.xpose.msra.mxu0 0.0
        %1086 = vmatprep.subr.mxu0 0.0
        %1087 = vmatpush1.xpose.msra.mxu0 0.0
        %1088 = vmatprep.subr.mxu0 0.0
        %1089 = vmatpush1.xpose.msra.mxu0 0.0
        %1090 = vmatprep.subr.mxu0 0.0
        %1091 = vmatpush1.xpose.msra.mxu0 0.0
        %1092 = vmatprep.subr.mxu0 0.0
        %1093 = vmatpush1.xpose.msra.mxu0 0.0
        %1094 = vmatprep.subr.mxu0 0.0
        %1095 = vmatpush1.xpose.msra.mxu0 0.0
        %1096 = vmatprep.subr.mxu0 0.0
        %1097 = vmatpush1.xpose.msra.mxu0 0.0
        %1098 = vmatprep.subr.mxu0 0.0
        %1099 = vmatpush1.xpose.msra.mxu0 0.0
        %1100 = vmatprep.subr.mxu0 0.0
        %1101 = vmatpush1.xpose.msra.mxu0 0.0
        %1102 = vmatprep.subr.mxu0 0.0
        %1103 = vmatpush1.xpose.msra.mxu0 0.0
        %1104 = vmatprep.subr.mxu0 0.0
        %1105 = vmatpush1.xpose.msra.mxu0 0.0
        %1106 = vmatprep.subr.mxu0 0.0
        %1107 = vmatpush1.xpose.msra.mxu0 0.0
        %1108 = vmatprep.subr.mxu0 0.0
        %1109 = vmatpush1.xpose.msra.mxu0 0.0
        %1110 = vmatprep.subr.mxu0 0.0
        %1111 = vmatpush1.xpose.msra.mxu0 0.0
        %1112 = vmatprep.subr.mxu0 0.0
        %1113 = vmatpush1.xpose.msra.mxu0 0.0
        %1114 = vmatprep.subr.mxu0 0.0
        %1115 = vmatpush1.xpose.msra.mxu0 0.0
        %1116 = vmatprep.subr.mxu0 0.0
        %1117 = vmatpush1.xpose.msra.mxu0 0.0
        %1118 = vmatprep.subr.mxu0 0.0
        %1119 = vmatpush1.xpose.msra.mxu0 0.0
        %1120 = vmatprep.subr.mxu0 0.0
        %1121 = vmatpush1.xpose.msra.mxu0 0.0
        %1122 = vmatprep.subr.mxu0 0.0
        %1123 = vmatpush1.xpose.msra.mxu0 0.0
        %1124 = vmatprep.subr.mxu0 0.0
        %1125 = vmatpush1.xpose.msra.mxu0 0.0
        %1126 = vmatprep.subr.mxu0 0.0
        %1127 = vmatpush1.xpose.msra.mxu0 0.0
        %1128 = vmatprep.subr.mxu0 0.0
        %1129 = vmatpush1.xpose.msra.mxu0 0.0
        %1130 = vmatprep.subr.mxu0 0.0
        %1131 = vmatpush1.xpose.msra.mxu0 0.0
        %1132 = vmatprep.subr.mxu0 0.0
        %1133 = vmatpush1.xpose.msra.mxu0 0.0
        %1134 = vmatprep.subr.mxu0 0.0
        %1135 = vmatpush1.xpose.msra.mxu0 0.0
        %1136 = vmatprep.subr.mxu0 0.0
        %1137 = vmatpush1.xpose.msra.mxu0 0.0
        %1138 = vmatprep.subr.mxu0 0.0
        %1139 = vmatpush1.xpose.msra.mxu0 0.0
        %1140 = vmatprep.mubr.f32.mxu0 0.0
        %1141 = vmatmul.mubr.f32.gmra.mrb[0].mxu0 %v1072
        %v1142 = vpop.f32.mrb[0].mxu0
        %v1143 = vadd.f32 0.0, %v1142
        %v1144 = vpop.f32.mrb[0].mxu0
        %1145 = vdwg.mxu0
        %v1146 = vmul.f32 %v1143, 0.35355338
        %v1147 = vsel %vm556, %v1146, -1e+30
        %v1148 = vsel %vm557, %v1147, -inf
        %1149 = vmax.xlane.f32.xlu0 %v1148
        %v1150 = vpop.xlane.xlu0 %1149
        %v1151 = vsub.f32 %v1147, %v1150
        %v1152 = vmul.f32 %v1151, 1.442695
        %v1153 = vpow.pop %v1152
        %v1154 = vsel %vm557, %v1153, 0.0
        %1155 = vadd.xlane.f32.xlu0 %v1154
        %v1156 = vpop.xlane.xlu0 %1155
        %v1157 = vrcp.pop %v1156
        %v1158 = vmul.f32 %v1153, %v1157
        %1159 = vrot.lane.b32.xlu0 %v549, 104
        %v1160 = vpop.permute.xlu0 %1159
        %v1163 = vsel %vm557, %v1158, 0
        %1165 = vmatprep.subr.mxu0 0.0
        %1166 = vmatpush1.msra.mxu0 %v1160
        %1167 = vmatprep.subr.mxu0 0.0
        %1168 = vmatpush1.msra.mxu0 0.0
        %1169 = vmatprep.subr.mxu0 0.0
        %1170 = vmatpush1.msra.mxu0 0.0
        %1171 = vmatprep.subr.mxu0 0.0
        %1172 = vmatpush1.msra.mxu0 0.0
        %1173 = vmatprep.subr.mxu0 0.0
        %1174 = vmatpush1.msra.mxu0 0.0
        %1175 = vmatprep.subr.mxu0 0.0
        %1176 = vmatpush1.msra.mxu0 0.0
        %1177 = vmatprep.subr.mxu0 0.0
        %1178 = vmatpush1.msra.mxu0 0.0
        %1179 = vmatprep.subr.mxu0 0.0
        %1180 = vmatpush1.msra.mxu0 0.0
        %1181 = vmatprep.subr.mxu0 0.0
        %1182 = vmatpush1.msra.mxu0 0.0
        %1183 = vmatprep.subr.mxu0 0.0
        %1184 = vmatpush1.msra.mxu0 0.0
        %1185 = vmatprep.subr.mxu0 0.0
        %1186 = vmatpush1.msra.mxu0 0.0
        %1187 = vmatprep.subr.mxu0 0.0
        %1188 = vmatpush1.msra.mxu0 0.0
        %1189 = vmatprep.subr.mxu0 0.0
        %1190 = vmatpush1.msra.mxu0 0.0
        %1191 = vmatprep.subr.mxu0 0.0
        %1192 = vmatpush1.msra.mxu0 0.0
        %1193 = vmatprep.subr.mxu0 0.0
        %1194 = vmatpush1.msra.mxu0 0.0
        %1195 = vmatprep.subr.mxu0 0.0
        %1196 = vmatpush1.msra.mxu0 0.0
        %1197 = vmatprep.subr.mxu0 0.0
        %1198 = vmatpush1.msra.mxu0 0.0
        %1199 = vmatprep.subr.mxu0 0.0
        %1200 = vmatpush1.msra.mxu0 0.0
        %1201 = vmatprep.subr.mxu0 0.0
        %1202 = vmatpush1.msra.mxu0 0.0
        %1203 = vmatprep.subr.mxu0 0.0
        %1204 = vmatpush1.msra.mxu0 0.0
        %1205 = vmatprep.subr.mxu0 0.0
        %1206 = vmatpush1.msra.mxu0 0.0
        %1207 = vmatprep.subr.mxu0 0.0
        %1208 = vmatpush1.msra.mxu0 0.0
        %1209 = vmatprep.subr.mxu0 0.0
        %1210 = vmatpush1.msra.mxu0 0.0
        %1211 = vmatprep.subr.mxu0 0.0
        %1212 = vmatpush1.msra.mxu0 0.0
        %1213 = vmatprep.subr.mxu0 0.0
        %1214 = vmatpush1.msra.mxu0 0.0
        %1215 = vmatprep.subr.mxu0 0.0
        %1216 = vmatpush1.msra.mxu0 0.0
        %1217 = vmatprep.subr.mxu0 0.0
        %1218 = vmatpush1.msra.mxu0 0.0
        %1219 = vmatprep.subr.mxu0 0.0
        %1220 = vmatpush1.msra.mxu0 0.0
        %1221 = vmatprep.subr.mxu0 0.0
        %1222 = vmatpush1.msra.mxu0 0.0
        %1223 = vmatprep.subr.mxu0 0.0
        %1224 = vmatpush1.msra.mxu0 0.0
        %1225 = vmatprep.subr.mxu0 0.0
        %1226 = vmatpush1.msra.mxu0 0.0
        %1227 = vmatprep.subr.mxu0 0.0
        %1228 = vmatpush1.msra.mxu0 0.0
        %1229 = vmatprep.mubr.f32.mxu0 0.0
        %1230 = vmatmul.mubr.f32.gmra.mrb[0].mxu0 %v1163
        %v1231 = vpop.f32.mrb[0].mxu0
        %v1232 = vadd.f32 0.0, %v1231
        %v1233 = vpop.f32.mrb[0].mxu0
        %1234 = vdwg.mxu0
        %1236 = vrot.lane.b32.xlu0 %v1232, 24
        %v1237 = vpop.permute.xlu0 %1236
        %vm1239 = vcmask 261312
        %1240 = vst.msk [vmem:[#allocation2] sm:$0xff] %vm1239, %v1237
        %v1241 = vld [vmem:[#allocation2] sm:$0xff]
        %v1242 = vld [vmem:[#allocation11] sm:$0xff]
        %v1243 = vld [vmem:[#allocation11 + $0x8] sm:$0xff]
        %v1244 = vld [vmem:[#allocation11 + $0x10] sm:$0xff]
        %v1245 = vld [vmem:[#allocation11 + $0x18] sm:$0xff]
        %v1246 = vld [vmem:[%s5] sm:$0x1]
        %v1248 = vlaneseq
        %v1249 = vshrl.u32 %v1248, 7
        %v1250 = vsub.s32 0, %v1249
        %v1251 = vrot.slane %v1246, %v1250
        %v1254 = vsel %vm330, %v1241, 0
        %1256 = vmatprep.subr.mxu0 0.0
        %1257 = vmatpush1.msra.mxu0 %v1242
        %1258 = vmatprep.subr.mxu0 0.0
        %1259 = vmatpush1.msra.mxu0 %v1243
        %1260 = vmatprep.subr.mxu0 0.0
        %1261 = vmatpush1.msra.mxu0 %v1244
        %1262 = vmatprep.subr.mxu0 0.0
        %1263 = vmatpush1.msra.mxu0 %v1245
        %1264 = vmatprep.subr.mxu0 0.0
        %1265 = vmatpush1.msra.mxu0 0.0
        %1266 = vmatprep.subr.mxu0 0.0
        %1267 = vmatpush1.msra.mxu0 0.0
        %1268 = vmatprep.subr.mxu0 0.0
        %1269 = vmatpush1.msra.mxu0 0.0
        %1270 = vmatprep.subr.mxu0 0.0
        %1271 = vmatpush1.msra.mxu0 0.0
        %1272 = vmatprep.subr.mxu0 0.0
        %1273 = vmatpush1.msra.mxu0 0.0
        %1274 = vmatprep.subr.mxu0 0.0
        %1275 = vmatpush1.msra.mxu0 0.0
        %1276 = vmatprep.subr.mxu0 0.0
        %1277 = vmatpush1.msra.mxu0 0.0
        %1278 = vmatprep.subr.mxu0 0.0
        %1279 = vmatpush1.msra.mxu0 0.0
        %1280 = vmatprep.subr.mxu0 0.0
        %1281 = vmatpush1.msra.mxu0 0.0
        %1282 = vmatprep.subr.mxu0 0.0
        %1283 = vmatpush1.msra.mxu0 0.0
        %1284 = vmatprep.subr.mxu0 0.0
        %1285 = vmatpush1.msra.mxu0 0.0
        %1286 = vmatprep.subr.mxu0 0.0
        %1287 = vmatpush1.msra.mxu0 0.0
        %1288 = vmatprep.subr.mxu0 0.0
        %1289 = vmatpush1.msra.mxu0 0.0
        %1290 = vmatprep.subr.mxu0 0.0
        %1291 = vmatpush1.msra.mxu0 0.0
        %1292 = vmatprep.subr.mxu0 0.0
        %1293 = vmatpush1.msra.mxu0 0.0
        %1294 = vmatprep.subr.mxu0 0.0
        %1295 = vmatpush1.msra.mxu0 0.0
        %1296 = vmatprep.subr.mxu0 0.0
        %1297 = vmatpush1.msra.mxu0 0.0
        %1298 = vmatprep.subr.mxu0 0.0
        %1299 = vmatpush1.msra.mxu0 0.0
        %1300 = vmatprep.subr.mxu0 0.0
        %1301 = vmatpush1.msra.mxu0 0.0
        %1302 = vmatprep.subr.mxu0 0.0
        %1303 = vmatpush1.msra.mxu0 0.0
        %1304 = vmatprep.subr.mxu0 0.0
        %1305 = vmatpush1.msra.mxu0 0.0
        %1306 = vmatprep.subr.mxu0 0.0
        %1307 = vmatpush1.msra.mxu0 0.0
        %1308 = vmatprep.subr.mxu0 0.0
        %1309 = vmatpush1.msra.mxu0 0.0
        %1310 = vmatprep.subr.mxu0 0.0
        %1311 = vmatpush1.msra.mxu0 0.0
        %1312 = vmatprep.subr.mxu0 0.0
        %1313 = vmatpush1.msra.mxu0 0.0
        %1314 = vmatprep.subr.mxu0 0.0
        %1315 = vmatpush1.msra.mxu0 0.0
        %1316 = vmatprep.subr.mxu0 0.0
        %1317 = vmatpush1.msra.mxu0 0.0
        %1318 = vmatprep.subr.mxu0 0.0
        %1319 = vmatpush1.msra.mxu0 0.0
        %1320 = vmatprep.mubr.f32.mxu0 0.0
        %1321 = vmatmul.mubr.f32.gmra.mrb[0].mxu0 %v1254
        %v1322 = vpop.f32.mrb[0].mxu0
        %v1323 = vadd.f32 %v1251, %v1322
        %v1324 = vpop.f32.mrb[0].mxu0
        %1325 = vdwg.mxu0
        %1326 = vst.msk [vmem:[%s324] sm:$0xff] %vm330, %v1323
        %s1327 = sand.u32 %s164, 1
        %s1328 = scalar_lea.sflag [#allocation5], %s1327
        %s1329 = sand.u32 %s164, 1
        %s1330 = smul.addr %s1329, 8
        %s1331 = scalar_lea.vmem [#allocation12], %s1330
        // Predicated region
        $region65: #{tpu_custom_call.1} parent=43 // pred_check
          %p1332 = pneg %p174
        $region66: #{tpu_custom_call.1} parent=43 // pred_check_branch
          %1334 = sbr.rel (%p1332) target = $region68
        $region67: #{tpu_custom_call.1} parent=43 // pred_region
          %s1336 = ssub.s32 128, 128
          %1337 = vsyncadd %s1328, %s1336
          %s1338 = smul.addr %s25, 128
          %s1339 = scalar_lea.hbm %s6, %s1338
          %s1341 = sshll.u32 %s1331, 4
          %s1342 = int_to_ptr.vmem [resolvable:$true] %s1341
          %1344 = dma.vmem_to_hbm [thread:$0]  %s1342, 128, %s1339, %s1328
        $region68: #{tpu_custom_call.1} parent=43 // pred_fallthru
          _
      $region44: #{tpu_custom_call.1} parent=5 // pred_fallthru
        _
      %p1345 = scmp.le.s32.totalorder 2, %s20
      // Predicated region
      $region69: #{tpu_custom_call.1} parent=5 // pred_check
        %p1346 = pneg %p1345
      $region70: #{tpu_custom_call.1} parent=5 // pred_check_branch
        %1348 = sbr.rel (%p1346) target = $region72
      $region71: #{tpu_custom_call.1} parent=5 // pred_region
        %s1349 = ssub.s32 %s20, 2
        // Predicated region
        $region73: #{tpu_custom_call.1} parent=71 // pred_check
          %p1350 = pneg %p180
        $region74: #{tpu_custom_call.1} parent=71 // pred_check_branch
          %1352 = sbr.rel (%p1350) target = $region76
        $region75: #{tpu_custom_call.1} parent=71 // pred_region
          %s1353 = sand.u32 %s165, 1
          %s1354 = scalar_lea.sflag [#allocation5], %s1353
          %s1355 = sand.u32 %s165, 1
          %s1356 = smul.addr %s1355, 8
          %s1357 = scalar_lea.vmem [#allocation12], %s1356
          %1358 = dma.done %s1354, 128
        $region76: #{tpu_custom_call.1} parent=71 // pred_fallthru
          _
      $region72: #{tpu_custom_call.1} parent=5 // pred_fallthru
        _
    $region6: #{tpu_custom_call.1} parent=1 // loop_footer
      %s24 = sadd.s32 1, %s20
    $region7: #{tpu_custom_call.1} parent=1 // loop_footer_branch
      %19 = sbr.rel target = $region3
    $region8: #{tpu_custom_call.1} parent=1 // loop_exit
      _
    %1359 = vsyncpa [#allocation4], 1
    %s1360 = scalar_lea.sflag [#allocation4], 1
    %1361 = vsyncpa %s1360, 1
    %1362 = vsyncpa [#allocation7], 1
    %1363 = vsyncpa [#allocation10], 1
    %1364 = vsyncpa [#allocation5], 1
    %s1365 = scalar_lea.sflag [#allocation5], 1
    %1366 = vsyncpa %s1365, 1

</llo_original>
